<compile_context>
chip_gen: v7x
topology: tpu7x:2x2x1
jax: 0.10.0
libtpu: 0.0.40
codegen_flags: <defaults>
</compile_context>

<pallas_src>
import numpy as np
import jax
import jax.numpy as jnp
from jax.experimental import pallas as pl
from jax.experimental.pallas import tpu as pltpu

NUM_BASIS = 10
DEGREE = 3                      # kernel below hard-codes the cubic weights
DOMAIN_MIN = -1.0
DOMAIN_MAX = 1.0
NUM_KNOTS = NUM_BASIS + DEGREE + 1          # 14
NUM_CELLS = NUM_KNOTS - 1                   # 13
INV_H = NUM_CELLS / (DOMAIN_MAX - DOMAIN_MIN)   # 1 / knot spacing = 6.5
# torch.linspace(domain_min, domain_max, num_basis + degree + 1) (float32)
KNOTS = np.linspace(DOMAIN_MIN, DOMAIN_MAX, NUM_KNOTS).astype(np.float32)


def bspline_kernel(x_ref, o_ref):
    # x_ref: (tb, tn) inputs; o_ref: (tb, NUM_BASIS, tn) outputs.
    x = jnp.clip(x_ref[...], DOMAIN_MIN, DOMAIN_MAX - 1e-7)

    # Uniform-knot reformulation: which cell, and where inside it.
    t = (x - DOMAIN_MIN) * INV_H            # in [0, NUM_CELLS)
    jf = jnp.floor(t)
    jf = jnp.minimum(jf, float(NUM_CELLS - 1))   # guard fp edge at the top clamp
    u = t - jf                               # fractional position in the cell

    # Four cardinal cubic B-spline weights (shared by all outputs).
    u2 = u * u
    u3 = u2 * u
    om = 1.0 - u
    om2 = om * om
    om3 = om2 * om
    w_a = u3 * (1.0 / 6.0)                           # basis i, cell j == i
    w_b = 0.5 * (u2 - u3 + u) + (1.0 / 6.0)          # basis i, cell j == i+1
    w_c = 0.5 * (om2 - om3 + om) + (1.0 / 6.0)       # basis i, cell j == i+2
    w_d = om3 * (1.0 / 6.0)                          # basis i, cell j == i+3

    # 13 shared cell masks, built lazily (sliding window keeps liveness low).
    masks = {}

    def cell_mask(c):
        if c not in masks:
            masks[c] = jf == float(c)
        return masks[c]

    outs = []
    for i in range(NUM_BASIS):
        r = jnp.where(cell_mask(i + 3), w_d, 0.0)
        r = jnp.where(cell_mask(i + 2), w_c, r)
        r = jnp.where(cell_mask(i + 1), w_b, r)
        r = jnp.where(cell_mask(i), w_a, r)
        outs.append(r)

    # One full-block store (Mosaic relayouts on the XLU, emits unmasked vst).
    o_ref[...] = jnp.stack(outs, axis=1).astype(o_ref.dtype)


def _round_up(v, m):
    return ((v + m - 1) // m) * m


def _pick_tile(dim, quantum, max_tile):
    """Largest multiple of `quantum` that divides `dim` and is <= max_tile."""
    best = quantum
    for t in range(quantum, min(dim, max_tile) + 1, quantum):
        if dim % t == 0:
            best = t
    return best


def _shrink_tile(dim, tile, quantum):
    """Largest multiple of `quantum` dividing `dim` that is < tile (else tile)."""
    for t in range(tile - quantum, quantum - 1, -quantum):
        if dim % t == 0:
            return t
    return tile


def bspline(x, *, tb=None, tn=None):
    """x: (B, N) float32 -> (B, NUM_BASIS, N) float32 (matches torch for 2-D input)."""
    B, N = x.shape
    # Pad to lane/sublane friendly sizes; slice the result back at the end.
    Bp = _round_up(B, 8)
    Np = _round_up(N, 128)
    xp = x if (Bp == B and Np == N) else jnp.pad(x, ((0, Bp - B), (0, Np - N)))

    # Tile selection. Double-buffered VMEM footprint is
    #   2*(tb*tn*4) + 2*(tb*16*tn*4) ~= 136*tb*tn bytes
    # (output block pads NUM_BASIS=10 up to 16 sublanes). tb<=128, tn<=512
    # -> ~9 MiB: safe on v7x (64 MiB VMEM) and v5e/v6e with default limits.
    if tn is None:
        tn = _pick_tile(Np, 128, 512)
    if tb is None:
        tb = _pick_tile(Bp, 8, 128)
    assert Bp % tb == 0 and Np % tn == 0 and tn % 128 == 0 and tb % 8 == 0

    # Compute-bound kernel: make sure there are enough tiles for both v7x
    # TensorCores (and some pipelining) — the per-step overhead is negligible.
    while (Bp // tb) * (Np // tn) < 4:
        if tn > 128:
            new_tn = _shrink_tile(Np, tn, 128)
            if new_tn < tn:
                tn = new_tn
                continue
        if tb > 8:
            new_tb = _shrink_tile(Bp, tb, 8)
            if new_tb < tb:
                tb = new_tb
                continue
        break

    grid = (Bp // tb, Np // tn)
    out = pl.pallas_call(
        bspline_kernel,
        out_shape=jax.ShapeDtypeStruct((Bp, NUM_BASIS, Np), x.dtype),
        grid_spec=pltpu.PrefetchScalarGridSpec(
            num_scalar_prefetch=0,
            grid=grid,
            in_specs=[pl.BlockSpec((tb, tn), lambda b, n: (b, n))],
            out_specs=pl.BlockSpec((tb, NUM_BASIS, tn), lambda b, n: (b, 0, n)),
        ),
        compiler_params=pltpu.CompilerParams(
            dimension_semantics=("parallel", "parallel"),
            vmem_limit_bytes=32 << 20,
        ),
    )(xp)
    if (Bp, Np) != (B, N):
        out = out[:B, :, :N]
    return out


# ----------------------------- reference ------------------------------------
def _cox_de_boor_ref(x, i, k):
    """Naive recursion mirroring the torch module exactly (with divisions)."""
    if k == 0:
        return jnp.where(
            (float(KNOTS[i]) <= x) & (x < float(KNOTS[i + 1])),
            jnp.ones_like(x),
            jnp.zeros_like(x),
        )
    d1 = float(KNOTS[i + k] - KNOTS[i])
    d2 = float(KNOTS[i + k + 1] - KNOTS[i + 1])
    t1 = jnp.zeros_like(x)
    t2 = jnp.zeros_like(x)
    if d1 > 1e-10:
        t1 = (x - float(KNOTS[i])) / d1 * _cox_de_boor_ref(x, i, k - 1)
    if d2 > 1e-10:
        t2 = (float(KNOTS[i + k + 1]) - x) / d2 * _cox_de_boor_ref(x, i + 1, k - 1)
    return t1 + t2


def _reference(x):
    xc = jnp.clip(x, DOMAIN_MIN, DOMAIN_MAX - 1e-7)
    basis = jnp.stack([_cox_de_boor_ref(xc, i, DEGREE) for i in range(NUM_BASIS)])
    return jnp.swapaxes(basis, 0, 1)


if __name__ == "__main__":
    key = jax.random.PRNGKey(0)

    # Main test shape (values inside and outside the domain exercise clamping).
    B, N = 32, 256
    x = jax.random.uniform(key, (B, N), dtype=jnp.float32, minval=-1.5, maxval=1.5)
    out = jax.block_until_ready(bspline(x))
    assert out.shape == (B, NUM_BASIS, N)
    assert out.dtype == jnp.float32
    ref = _reference(x)
    # atol relaxed vs 1e-6: cardinal-weight formulation vs the divide-based
    # recursion on float32 linspace knots differs by a few ulps.
    np.testing.assert_allclose(np.asarray(out), np.asarray(ref), rtol=1e-5, atol=1e-5)

    # Non-aligned shape exercises the pad-and-slice path.
    key2 = jax.random.PRNGKey(1)
    B2, N2 = 5, 100
    x2 = jax.random.uniform(key2, (B2, N2), dtype=jnp.float32, minval=-1.5, maxval=1.5)
    out2 = jax.block_until_ready(bspline(x2))
    assert out2.shape == (B2, NUM_BASIS, N2)
    np.testing.assert_allclose(
        np.asarray(out2), np.asarray(_reference(x2)), rtol=1e-5, atol=1e-5
    )

    print("KERNEL_OK")
</pallas_src>

<mosaic_0001>
module attributes {stable_mosaic.version = 11 : i64} {
  func.func @bspline_kernel(%arg0: i32, %arg1: i32, %arg2: memref<16x128xf32, #tpu.memory_space<vmem>>, %arg3: memref<16x10x128xf32, #tpu.memory_space<vmem>>) attributes {dimension_semantics = [#tpu.dimension_semantics<parallel>, #tpu.dimension_semantics<parallel>], iteration_bounds = array<i64: 2, 2>, scalar_prefetch = 0 : i64, scratch_operands = 0 : i64, tpu.core_type = #tpu.core_type<tc>, window_params = [{transform_indices = @transform_0, window_bounds = array<i64: 16, 128>}, {transform_indices = @transform_1, window_bounds = array<i64: 16, 10, 128>}]} {
    %c0 = arith.constant 0 : index
    %c0_0 = arith.constant 0 : index
    %0 = vector.load %arg2[%c0, %c0_0] : memref<16x128xf32, #tpu.memory_space<vmem>>, vector<16x128xf32>
    %cst = arith.constant -1.000000e+00 : f32
    %cst_1 = arith.constant 0.99999988 : f32
    %1 = vector.broadcast %cst : f32 to vector<16x128xf32>
    %2 = arith.maximumf %1, %0 : vector<16x128xf32>
    %3 = vector.broadcast %cst_1 : f32 to vector<16x128xf32>
    %4 = arith.minimumf %3, %2 : vector<16x128xf32>
    %cst_2 = arith.constant -1.000000e+00 : f32
    %5 = vector.broadcast %cst_2 : f32 to vector<16x128xf32>
    %6 = arith.subf %4, %5 : vector<16x128xf32>
    %cst_3 = arith.constant 6.500000e+00 : f32
    %7 = vector.broadcast %cst_3 : f32 to vector<16x128xf32>
    %8 = arith.mulf %6, %7 : vector<16x128xf32>
    %9 = math.floor %8 : vector<16x128xf32>
    %cst_4 = arith.constant 1.200000e+01 : f32
    %10 = vector.broadcast %cst_4 : f32 to vector<16x128xf32>
    %11 = arith.minimumf %9, %10 : vector<16x128xf32>
    %12 = arith.subf %8, %11 : vector<16x128xf32>
    %13 = arith.mulf %12, %12 : vector<16x128xf32>
    %14 = arith.mulf %13, %12 : vector<16x128xf32>
    %cst_5 = arith.constant 1.000000e+00 : f32
    %15 = vector.broadcast %cst_5 : f32 to vector<16x128xf32>
    %16 = arith.subf %15, %12 : vector<16x128xf32>
    %17 = arith.mulf %16, %16 : vector<16x128xf32>
    %18 = arith.mulf %17, %16 : vector<16x128xf32>
    %cst_6 = arith.constant 0.166666672 : f32
    %19 = vector.broadcast %cst_6 : f32 to vector<16x128xf32>
    %20 = arith.mulf %14, %19 : vector<16x128xf32>
    %21 = arith.subf %13, %14 : vector<16x128xf32>
    %22 = arith.addf %21, %12 : vector<16x128xf32>
    %cst_7 = arith.constant 5.000000e-01 : f32
    %23 = vector.broadcast %cst_7 : f32 to vector<16x128xf32>
    %24 = arith.mulf %23, %22 : vector<16x128xf32>
    %cst_8 = arith.constant 0.166666672 : f32
    %25 = vector.broadcast %cst_8 : f32 to vector<16x128xf32>
    %26 = arith.addf %24, %25 : vector<16x128xf32>
    %27 = arith.subf %17, %18 : vector<16x128xf32>
    %28 = arith.addf %27, %16 : vector<16x128xf32>
    %cst_9 = arith.constant 5.000000e-01 : f32
    %29 = vector.broadcast %cst_9 : f32 to vector<16x128xf32>
    %30 = arith.mulf %29, %28 : vector<16x128xf32>
    %cst_10 = arith.constant 0.166666672 : f32
    %31 = vector.broadcast %cst_10 : f32 to vector<16x128xf32>
    %32 = arith.addf %30, %31 : vector<16x128xf32>
    %cst_11 = arith.constant 0.166666672 : f32
    %33 = vector.broadcast %cst_11 : f32 to vector<16x128xf32>
    %34 = arith.mulf %18, %33 : vector<16x128xf32>
    %cst_12 = arith.constant 3.000000e+00 : f32
    %35 = vector.broadcast %cst_12 : f32 to vector<16x128xf32>
    %36 = arith.cmpf oeq, %11, %35 : vector<16x128xf32>
    %cst_13 = arith.constant 0.000000e+00 : f32
    %37 = vector.broadcast %cst_13 : f32 to vector<16x128xf32>
    %38 = arith.select %36, %34, %37 : vector<16x128xi1>, vector<16x128xf32>
    %cst_14 = arith.constant 2.000000e+00 : f32
    %39 = vector.broadcast %cst_14 : f32 to vector<16x128xf32>
    %40 = arith.cmpf oeq, %11, %39 : vector<16x128xf32>
    %41 = arith.select %40, %32, %38 : vector<16x128xi1>, vector<16x128xf32>
    %cst_15 = arith.constant 1.000000e+00 : f32
    %42 = vector.broadcast %cst_15 : f32 to vector<16x128xf32>
    %43 = arith.cmpf oeq, %11, %42 : vector<16x128xf32>
    %44 = arith.select %43, %26, %41 : vector<16x128xi1>, vector<16x128xf32>
    %cst_16 = arith.constant 0.000000e+00 : f32
    %45 = vector.broadcast %cst_16 : f32 to vector<16x128xf32>
    %46 = arith.cmpf oeq, %11, %45 : vector<16x128xf32>
    %47 = arith.select %46, %20, %44 : vector<16x128xi1>, vector<16x128xf32>
    %cst_17 = arith.constant 4.000000e+00 : f32
    %48 = vector.broadcast %cst_17 : f32 to vector<16x128xf32>
    %49 = arith.cmpf oeq, %11, %48 : vector<16x128xf32>
    %cst_18 = arith.constant 0.000000e+00 : f32
    %50 = vector.broadcast %cst_18 : f32 to vector<16x128xf32>
    %51 = arith.select %49, %34, %50 : vector<16x128xi1>, vector<16x128xf32>
    %52 = arith.select %36, %32, %51 : vector<16x128xi1>, vector<16x128xf32>
    %53 = arith.select %40, %26, %52 : vector<16x128xi1>, vector<16x128xf32>
    %54 = arith.select %43, %20, %53 : vector<16x128xi1>, vector<16x128xf32>
    %cst_19 = arith.constant 5.000000e+00 : f32
    %55 = vector.broadcast %cst_19 : f32 to vector<16x128xf32>
    %56 = arith.cmpf oeq, %11, %55 : vector<16x128xf32>
    %cst_20 = arith.constant 0.000000e+00 : f32
    %57 = vector.broadcast %cst_20 : f32 to vector<16x128xf32>
    %58 = arith.select %56, %34, %57 : vector<16x128xi1>, vector<16x128xf32>
    %59 = arith.select %49, %32, %58 : vector<16x128xi1>, vector<16x128xf32>
    %60 = arith.select %36, %26, %59 : vector<16x128xi1>, vector<16x128xf32>
    %61 = arith.select %40, %20, %60 : vector<16x128xi1>, vector<16x128xf32>
    %cst_21 = arith.constant 6.000000e+00 : f32
    %62 = vector.broadcast %cst_21 : f32 to vector<16x128xf32>
    %63 = arith.cmpf oeq, %11, %62 : vector<16x128xf32>
    %cst_22 = arith.constant 0.000000e+00 : f32
    %64 = vector.broadcast %cst_22 : f32 to vector<16x128xf32>
    %65 = arith.select %63, %34, %64 : vector<16x128xi1>, vector<16x128xf32>
    %66 = arith.select %56, %32, %65 : vector<16x128xi1>, vector<16x128xf32>
    %67 = arith.select %49, %26, %66 : vector<16x128xi1>, vector<16x128xf32>
    %68 = arith.select %36, %20, %67 : vector<16x128xi1>, vector<16x128xf32>
    %cst_23 = arith.constant 7.000000e+00 : f32
    %69 = vector.broadcast %cst_23 : f32 to vector<16x128xf32>
    %70 = arith.cmpf oeq, %11, %69 : vector<16x128xf32>
    %cst_24 = arith.constant 0.000000e+00 : f32
    %71 = vector.broadcast %cst_24 : f32 to vector<16x128xf32>
    %72 = arith.select %70, %34, %71 : vector<16x128xi1>, vector<16x128xf32>
    %73 = arith.select %63, %32, %72 : vector<16x128xi1>, vector<16x128xf32>
    %74 = arith.select %56, %26, %73 : vector<16x128xi1>, vector<16x128xf32>
    %75 = arith.select %49, %20, %74 : vector<16x128xi1>, vector<16x128xf32>
    %cst_25 = arith.constant 8.000000e+00 : f32
    %76 = vector.broadcast %cst_25 : f32 to vector<16x128xf32>
    %77 = arith.cmpf oeq, %11, %76 : vector<16x128xf32>
    %cst_26 = arith.constant 0.000000e+00 : f32
    %78 = vector.broadcast %cst_26 : f32 to vector<16x128xf32>
    %79 = arith.select %77, %34, %78 : vector<16x128xi1>, vector<16x128xf32>
    %80 = arith.select %70, %32, %79 : vector<16x128xi1>, vector<16x128xf32>
    %81 = arith.select %63, %26, %80 : vector<16x128xi1>, vector<16x128xf32>
    %82 = arith.select %56, %20, %81 : vector<16x128xi1>, vector<16x128xf32>
    %cst_27 = arith.constant 9.000000e+00 : f32
    %83 = vector.broadcast %cst_27 : f32 to vector<16x128xf32>
    %84 = arith.cmpf oeq, %11, %83 : vector<16x128xf32>
    %cst_28 = arith.constant 0.000000e+00 : f32
    %85 = vector.broadcast %cst_28 : f32 to vector<16x128xf32>
    %86 = arith.select %84, %34, %85 : vector<16x128xi1>, vector<16x128xf32>
    %87 = arith.select %77, %32, %86 : vector<16x128xi1>, vector<16x128xf32>
    %88 = arith.select %70, %26, %87 : vector<16x128xi1>, vector<16x128xf32>
    %89 = arith.select %63, %20, %88 : vector<16x128xi1>, vector<16x128xf32>
    %cst_29 = arith.constant 1.000000e+01 : f32
    %90 = vector.broadcast %cst_29 : f32 to vector<16x128xf32>
    %91 = arith.cmpf oeq, %11, %90 : vector<16x128xf32>
    %cst_30 = arith.constant 0.000000e+00 : f32
    %92 = vector.broadcast %cst_30 : f32 to vector<16x128xf32>
    %93 = arith.select %91, %34, %92 : vector<16x128xi1>, vector<16x128xf32>
    %94 = arith.select %84, %32, %93 : vector<16x128xi1>, vector<16x128xf32>
    %95 = arith.select %77, %26, %94 : vector<16x128xi1>, vector<16x128xf32>
    %96 = arith.select %70, %20, %95 : vector<16x128xi1>, vector<16x128xf32>
    %cst_31 = arith.constant 1.100000e+01 : f32
    %97 = vector.broadcast %cst_31 : f32 to vector<16x128xf32>
    %98 = arith.cmpf oeq, %11, %97 : vector<16x128xf32>
    %cst_32 = arith.constant 0.000000e+00 : f32
    %99 = vector.broadcast %cst_32 : f32 to vector<16x128xf32>
    %100 = arith.select %98, %34, %99 : vector<16x128xi1>, vector<16x128xf32>
    %101 = arith.select %91, %32, %100 : vector<16x128xi1>, vector<16x128xf32>
    %102 = arith.select %84, %26, %101 : vector<16x128xi1>, vector<16x128xf32>
    %103 = arith.select %77, %20, %102 : vector<16x128xi1>, vector<16x128xf32>
    %cst_33 = arith.constant 1.200000e+01 : f32
    %104 = vector.broadcast %cst_33 : f32 to vector<16x128xf32>
    %105 = arith.cmpf oeq, %11, %104 : vector<16x128xf32>
    %cst_34 = arith.constant 0.000000e+00 : f32
    %106 = vector.broadcast %cst_34 : f32 to vector<16x128xf32>
    %107 = arith.select %105, %34, %106 : vector<16x128xi1>, vector<16x128xf32>
    %108 = arith.select %98, %32, %107 : vector<16x128xi1>, vector<16x128xf32>
    %109 = arith.select %91, %26, %108 : vector<16x128xi1>, vector<16x128xf32>
    %110 = arith.select %84, %20, %109 : vector<16x128xi1>, vector<16x128xf32>
    %111 = vector.shape_cast %47 : vector<16x128xf32> to vector<16x1x128xf32>
    %112 = vector.shape_cast %54 : vector<16x128xf32> to vector<16x1x128xf32>
    %113 = vector.shape_cast %61 : vector<16x128xf32> to vector<16x1x128xf32>
    %114 = vector.shape_cast %68 : vector<16x128xf32> to vector<16x1x128xf32>
    %115 = vector.shape_cast %75 : vector<16x128xf32> to vector<16x1x128xf32>
    %116 = vector.shape_cast %82 : vector<16x128xf32> to vector<16x1x128xf32>
    %117 = vector.shape_cast %89 : vector<16x128xf32> to vector<16x1x128xf32>
    %118 = vector.shape_cast %96 : vector<16x128xf32> to vector<16x1x128xf32>
    %119 = vector.shape_cast %103 : vector<16x128xf32> to vector<16x1x128xf32>
    %120 = vector.shape_cast %110 : vector<16x128xf32> to vector<16x1x128xf32>
    %121 = tpu.concatenate %111, %112, %113, %114, %115, %116, %117, %118, %119, %120 in 1 : vector<16x1x128xf32>, vector<16x1x128xf32>, vector<16x1x128xf32>, vector<16x1x128xf32>, vector<16x1x128xf32>, vector<16x1x128xf32>, vector<16x1x128xf32>, vector<16x1x128xf32>, vector<16x1x128xf32>, vector<16x1x128xf32> -> vector<16x10x128xf32>
    %c0_35 = arith.constant 0 : index
    %c0_36 = arith.constant 0 : index
    %c0_37 = arith.constant 0 : index
    %122 = vector.load %arg3[%c0_35, %c0_36, %c0_37] : memref<16x10x128xf32, #tpu.memory_space<vmem>>, vector<16x10x128xf32>
    tpu.vector_store %arg3[%c0_35, %c0_36, %c0_37], %121 {strides = array<i32>} : memref<16x10x128xf32, #tpu.memory_space<vmem>>, vector<16x10x128xf32>,
    return
  }
  func.func @transform_0(%arg0: i32, %arg1: i32) -> (i32, i32) {
    %c0_i32 = arith.constant 0 : i32
    return %arg0, %arg1 : i32, i32
  }
  func.func @transform_1(%arg0: i32, %arg1: i32) -> (i32, i32, i32) {
    %c0_i32 = arith.constant 0 : i32
    %c0_i32_0 = arith.constant 0 : i32
    return %arg0, %c0_i32, %arg1 : i32, i32, i32
  }
}

</mosaic_0001>

<llo_original>
// kernel: tpu_custom_call.1
$region0: #{tpu_custom_call.1}
  #allocation0 [shape = 'u32[]', space=smem, size = 0x4, offset = 0x4, fixed_abs, tag = 'smem constant byte address 0x4 - core index']
  #allocation1 [shape = 'u32[144,128]{1,0:T(1,128)}', space=vmem, size = 0x12000, scoped, tag = 'internal scratch']
  %s0 = inlined_call_operand.hbm [shape: f32[32,256], index: 0, kind: input, shape index: {}]
  %s1 = inlined_call_operand.vmem [shape: f32[32,10,256], index: 1, kind: output, shape index: {}]
  %s2 = sld [smem:[#allocation0]]
  $region75: #{tpu_custom_call.1} parent=0
    _
  %s4 = ssub.s32 1, %s2
  %s5 = scalar_select 0, %s4, %s2
  $region1: #{tpu_custom_call.1} parent=0
    #allocation2 [shape = 'u8[16384]{0}', space=vmem, size = 0x4000, scoped, tag = 'input window, operand 0']
    #allocation3 [shape = 's32[2]{0}', space=sflag, size = 0x8, scoped, tag = 'scoped memory for tpu_custom_call.1']
    #allocation4 [shape = 'u8[262144]{0}', space=vmem, size = 0x40000, scoped, tag = 'output window, operand 0']
    %6 = vsyncpa [#allocation3], 0
    %s7 = scalar_lea.sflag [#allocation3], 1
    %8 = vsyncpa %s7, 0
    loop: start=0, step=1, limit=6
    $region2: #{tpu_custom_call.1} parent=1 // loop_pre_header
      _
    $region3: #{tpu_custom_call.1} parent=1 // loop_header
      %s10 = sphi 0, %s14
      %p11 = scmp.ge.s32.totalorder %s10, 6
      %s17 = sphi 0, %s29
      %s18 = sphi 0, %s25
      %s19 = sphi 0, %s17
      %s20 = sphi 0, %s18
      %s21 = sphi 0, %s19
      %s22 = sphi 0, %s20
      %s34 = sphi 0, %s36
      %s37 = sphi 0, %s34
      %s38 = sphi 0, %s37
      %s54 = sphi 0, %s38
      %s62 = sphi 0, %s64
      %s65 = sphi 0, %s62
      %s66 = sphi 0, %s65
      %s82 = sphi 0, %s66
    $region4: #{tpu_custom_call.1} parent=1 // loop_header_branch
      %13 = sbr.rel (%p11) target = $region8
    $region5: #{tpu_custom_call.1} parent=1 // loop_body
      %s15 = ssub.s32 %s10, 1
      %s16 = ssub.s32 %s10, 2
      %s23 = sadd.s32 1, %s18
      %p24 = scmp.ge.s32.totalorder %s23, 2
      %s25 = scalar_select %p24, 0, %s23
      %s26 = sadd.s32 1, %s17
      %s27 = scalar_select %p24, %s26, %s17
      %p28 = scmp.ge.s32.totalorder %s27, 2
      %s29 = scalar_select %p28, 0, %s27
      %s30 = ssub.s32 %s17, %s29
      %s31 = ssub.s32 %s18, %s25
      %s32 = sor.u32 %s30, %s31
      %p33 = scmp.eq.s32.totalorder %s32, 0
      %s35 = sadd.s32 %s34, 1
      %s36 = scalar_select %p33, %s34, %s35
      %p39 = pneg %p33
      %p40 = scmp.eq.s32.totalorder %s10, 3
      %p41 = por %p39, %p40
      %p42 = scmp.ne.s32.totalorder %s34, %s37
      %p43 = scmp.eq.s32.totalorder %s10, 0
      %p44 = por %p42, %p43
      %p45 = scmp.ne.s32.totalorder %s34, %s37
      %p46 = scmp.eq.s32.totalorder %s15, 3
      %p47 = por %p45, %p46
      %p48 = scmp.ne.s32.totalorder %s37, %s38
      %p49 = scmp.eq.s32.totalorder %s15, 0
      %p50 = por %p48, %p49
      %p51 = scmp.ne.s32.totalorder %s37, %s38
      %p52 = scmp.eq.s32.totalorder %s16, 3
      %p53 = por %p51, %p52
      %p55 = scmp.ne.s32.totalorder %s38, %s54
      %p56 = scmp.eq.s32.totalorder %s16, 0
      %p57 = por %p55, %p56
      %s58 = ssub.s32 %s17, %s29
      %s59 = ssub.s32 %s18, %s25
      %s60 = sor.u32 %s58, %s59
      %p61 = scmp.eq.s32.totalorder %s60, 0
      %s63 = sadd.s32 %s62, 1
      %s64 = scalar_select %p61, %s62, %s63
      %p67 = pneg %p61
      %p68 = scmp.eq.s32.totalorder %s10, 3
      %p69 = por %p67, %p68
      %p70 = scmp.ne.s32.totalorder %s62, %s65
      %p71 = scmp.eq.s32.totalorder %s10, 0
      %p72 = por %p70, %p71
      %p73 = scmp.ne.s32.totalorder %s62, %s65
      %p74 = scmp.eq.s32.totalorder %s15, 3
      %p75 = por %p73, %p74
      %p76 = scmp.ne.s32.totalorder %s65, %s66
      %p77 = scmp.eq.s32.totalorder %s15, 0
      %p78 = por %p76, %p77
      %p79 = scmp.ne.s32.totalorder %s65, %s66
      %p80 = scmp.eq.s32.totalorder %s16, 3
      %p81 = por %p79, %p80
      %p83 = scmp.ne.s32.totalorder %s66, %s82
      %p84 = scmp.eq.s32.totalorder %s16, 0
      %p85 = por %p83, %p84
      %p86 = scmp.le.s32.totalorder 1, %s10
      %p87 = scmp.lt.s32.totalorder %s10, 5
      %p88 = pnand %p86, %p87
      %p89 = pneg %p88
      // Predicated region
      $region9: #{tpu_custom_call.1} parent=5 // pred_check
        _
      $region10: #{tpu_custom_call.1} parent=5 // pred_check_branch
        %91 = sbr.rel (%p88) target = $region12
      $region11: #{tpu_custom_call.1} parent=5 // pred_region
        %s92 = ssub.s32 %s10, 1
      $region12: #{tpu_custom_call.1} parent=5 // pred_fallthru
        _
      %p93 = scmp.lt.s32.totalorder %s10, 4
      // Predicated region
      $region13: #{tpu_custom_call.1} parent=5 // pred_check
        %p94 = pneg %p93
      $region14: #{tpu_custom_call.1} parent=5 // pred_check_branch
        %96 = sbr.rel (%p94) target = $region16
      $region15: #{tpu_custom_call.1} parent=5 // pred_region
        // Predicated region
        $region17: #{tpu_custom_call.1} parent=15 // pred_check
          %p97 = pneg %p44
        $region18: #{tpu_custom_call.1} parent=15 // pred_check_branch
          %99 = sbr.rel (%p97) target = $region20
        $region19: #{tpu_custom_call.1} parent=15 // pred_region
          %s100 = sand.u32 %s34, 1
          %s101 = scalar_lea.sflag [#allocation3], %s100
          %s102 = sand.u32 %s34, 1
          %s103 = smul.addr %s102, 16
          %s104 = scalar_lea.vmem [#allocation2], %s103
          %s105 = smul.u32 2, %s17
          %s107 = ssub.s32 256, 256
          %108 = vsyncadd %s101, %s107
          %s109 = smul.addr %s105, 2
          %s110 = sadd.s32 %s18, %s109
          %s111 = smul.addr %s110, 128
          %s112 = scalar_lea.hbm %s0, %s111
          %s113 = sshll.u32 %s104, 4
          %s114 = int_to_ptr.vmem [resolvable:$true] %s113
          %119 = dma.hbm_to_vmem [thread:$0]  %s112, 256, %s114, %s101, 256, 128, 8
        $region20: #{tpu_custom_call.1} parent=15 // pred_fallthru
          _
      $region16: #{tpu_custom_call.1} parent=5 // pred_fallthru
        _
      %p120 = scmp.le.s32.totalorder 1, %s10
      %p121 = scmp.lt.s32.totalorder %s10, 5
      %p122 = pnand %p120, %p121
      %p123 = pneg %p122
      // Predicated region
      $region21: #{tpu_custom_call.1} parent=5 // pred_check
        _
      $region22: #{tpu_custom_call.1} parent=5 // pred_check_branch
        %125 = sbr.rel (%p122) target = $region24
      $region23: #{tpu_custom_call.1} parent=5 // pred_region
        %s126 = ssub.s32 %s10, 1
        %s127 = sand.u32 %s37, 1
        %s128 = scalar_lea.sflag [#allocation3], %s127
        %s129 = sand.u32 %s37, 1
        %s130 = smul.addr %s129, 16
        %s131 = scalar_lea.vmem [#allocation2], %s130
        // Predicated region
        $region25: #{tpu_custom_call.1} parent=23 // pred_check
          %p132 = pneg %p50
        $region26: #{tpu_custom_call.1} parent=23 // pred_check_branch
          %134 = sbr.rel (%p132) target = $region28
        $region27: #{tpu_custom_call.1} parent=23 // pred_region
          %135 = dma.done %s128, 256
        $region28: #{tpu_custom_call.1} parent=23 // pred_fallthru
          _
        %s136 = sand.u32 %s37, 1
        %s137 = scalar_lea.sflag [#allocation3], %s136
        %s138 = sand.u32 %s37, 1
        %s139 = smul.addr %s138, 16
        %s140 = scalar_lea.vmem [#allocation2], %s139
        %p141 = pneg %p50
        %p142 = pneg %p47
        %p143 = pneg %p78
        %p144 = pneg %p75
        %s145 = sand.u32 %s65, 1
        %s146 = sand.u32 %s65, 1
        %s147 = smul.addr %s146, 256
        %s148 = scalar_lea.vmem [#allocation4], %s147
        %s149 = smul.u32 2, %s19
        %s150 = smul.u32 16, %s19
        %v151 = vld [vmem:[%s131] sm:$0xff]
        %v152 = vld [vmem:[%s131 + $0x8] sm:$0xff]
        %v153 = vmax.f32 %v151, -1.0
        %v154 = vmax.f32 %v152, -1.0
        %v155 = vmin.f32 %v153, 0.9999999
        %v156 = vmin.f32 %v154, 0.9999999
        %v157 = vsub.f32 %v155, -1.0
        %v158 = vsub.f32 %v156, -1.0
        %v159 = vmul.f32 %v157, 6.5
        %v160 = vmul.f32 %v158, 6.5
        %v161 = vfloor.f32 %v159
        %v162 = vfloor.f32 %v160
        %v163 = vmin.f32 %v161, 12.0
        %v164 = vmin.f32 %v162, 12.0
        %v165 = vsub.f32 %v159, %v163
        %v166 = vsub.f32 %v160, %v164
        %v167 = vmul.f32 %v165, %v165
        %v168 = vmul.f32 %v166, %v166
        %v169 = vmul.f32 %v167, %v165
        %v170 = vmul.f32 %v168, %v166
        %v171 = vsub.f32 1.0, %v165
        %v172 = vsub.f32 1.0, %v166
        %v173 = vmul.f32 %v171, %v171
        %v174 = vmul.f32 %v172, %v172
        %v175 = vmul.f32 %v173, %v171
        %v176 = vmul.f32 %v174, %v172
        %v177 = vmul.f32 %v169, 0.16666667
        %v178 = vmul.f32 %v170, 0.16666667
        %v179 = vsub.f32 %v167, %v169
        %v180 = vsub.f32 %v168, %v170
        %v181 = vadd.f32 %v179, %v165
        %v182 = vadd.f32 %v180, %v166
        %v183 = vmul.f32 %v181, 0.5
        %v184 = vmul.f32 %v182, 0.5
        %v185 = vadd.f32 %v183, 0.16666667
        %v186 = vadd.f32 %v184, 0.16666667
        %v187 = vsub.f32 %v173, %v175
        %v188 = vsub.f32 %v174, %v176
        %v189 = vadd.f32 %v187, %v171
        %v190 = vadd.f32 %v188, %v172
        %v191 = vmul.f32 %v189, 0.5
        %v192 = vmul.f32 %v190, 0.5
        %v193 = vadd.f32 %v191, 0.16666667
        %v194 = vadd.f32 %v192, 0.16666667
        %v195 = vmul.f32 %v175, 0.16666667
        %v196 = vmul.f32 %v176, 0.16666667
        %vm197 = vcmp.eq.f32.partialorder %v163, 3.0
        %vm198 = vcmp.eq.f32.partialorder %v164, 3.0
        %v199 = vsel %vm197, %v195, 0.0
        %v200 = vsel %vm198, %v196, 0.0
        %vm201 = vcmp.eq.f32.partialorder %v163, 2.0
        %vm202 = vcmp.eq.f32.partialorder %v164, 2.0
        %v203 = vsel %vm201, %v193, %v199
        %v204 = vsel %vm202, %v194, %v200
        %vm205 = vcmp.eq.f32.partialorder %v163, 1.0
        %vm206 = vcmp.eq.f32.partialorder %v164, 1.0
        %v207 = vsel %vm205, %v185, %v203
        %v208 = vsel %vm206, %v186, %v204
        %vm209 = vcmp.eq.f32.partialorder %v163, 0.0
        %vm210 = vcmp.eq.f32.partialorder %v164, 0.0
        %v211 = vsel %vm209, %v177, %v207
        %v212 = vsel %vm210, %v178, %v208
        %vm213 = vcmp.eq.f32.partialorder %v163, 4.0
        %vm214 = vcmp.eq.f32.partialorder %v164, 4.0
        %v215 = vsel %vm213, %v195, 0.0
        %v216 = vsel %vm214, %v196, 0.0
        %v217 = vsel %vm197, %v193, %v215
        %v218 = vsel %vm198, %v194, %v216
        %v219 = vsel %vm201, %v185, %v217
        %v220 = vsel %vm202, %v186, %v218
        %v221 = vsel %vm205, %v177, %v219
        %v222 = vsel %vm206, %v178, %v220
        %vm223 = vcmp.eq.f32.partialorder %v163, 5.0
        %vm224 = vcmp.eq.f32.partialorder %v164, 5.0
        %v225 = vsel %vm223, %v195, 0.0
        %v226 = vsel %vm224, %v196, 0.0
        %v227 = vsel %vm213, %v193, %v225
        %v228 = vsel %vm214, %v194, %v226
        %v229 = vsel %vm197, %v185, %v227
        %v230 = vsel %vm198, %v186, %v228
        %v231 = vsel %vm201, %v177, %v229
        %v232 = vsel %vm202, %v178, %v230
        %vm233 = vcmp.eq.f32.partialorder %v163, 6.0
        %vm234 = vcmp.eq.f32.partialorder %v164, 6.0
        %v235 = vsel %vm233, %v195, 0.0
        %v236 = vsel %vm234, %v196, 0.0
        %v237 = vsel %vm223, %v193, %v235
        %v238 = vsel %vm224, %v194, %v236
        %v239 = vsel %vm213, %v185, %v237
        %v240 = vsel %vm214, %v186, %v238
        %v241 = vsel %vm197, %v177, %v239
        %v242 = vsel %vm198, %v178, %v240
        %vm243 = vcmp.eq.f32.partialorder %v163, 7.0
        %vm244 = vcmp.eq.f32.partialorder %v164, 7.0
        %v245 = vsel %vm243, %v195, 0.0
        %v246 = vsel %vm244, %v196, 0.0
        %v247 = vsel %vm233, %v193, %v245
        %v248 = vsel %vm234, %v194, %v246
        %v249 = vsel %vm223, %v185, %v247
        %v250 = vsel %vm224, %v186, %v248
        %v251 = vsel %vm213, %v177, %v249
        %v252 = vsel %vm214, %v178, %v250
        %vm253 = vcmp.eq.f32.partialorder %v163, 8.0
        %vm254 = vcmp.eq.f32.partialorder %v164, 8.0
        %v255 = vsel %vm253, %v195, 0.0
        %v256 = vsel %vm254, %v196, 0.0
        %v257 = vsel %vm243, %v193, %v255
        %v258 = vsel %vm244, %v194, %v256
        %v259 = vsel %vm233, %v185, %v257
        %v260 = vsel %vm234, %v186, %v258
        %v261 = vsel %vm223, %v177, %v259
        %v262 = vsel %vm224, %v178, %v260
        %vm263 = vcmp.eq.f32.partialorder %v163, 9.0
        %vm264 = vcmp.eq.f32.partialorder %v164, 9.0
        %v265 = vsel %vm263, %v195, 0.0
        %v266 = vsel %vm264, %v196, 0.0
        %v267 = vsel %vm253, %v193, %v265
        %v268 = vsel %vm254, %v194, %v266
        %v269 = vsel %vm243, %v185, %v267
        %v270 = vsel %vm244, %v186, %v268
        %v271 = vsel %vm233, %v177, %v269
        %v272 = vsel %vm234, %v178, %v270
        %vm273 = vcmp.eq.f32.partialorder %v163, 10.0
        %vm274 = vcmp.eq.f32.partialorder %v164, 10.0
        %v275 = vsel %vm273, %v195, 0.0
        %v276 = vsel %vm274, %v196, 0.0
        %v277 = vsel %vm263, %v193, %v275
        %v278 = vsel %vm264, %v194, %v276
        %v279 = vsel %vm253, %v185, %v277
        %v280 = vsel %vm254, %v186, %v278
        %v281 = vsel %vm243, %v177, %v279
        %v282 = vsel %vm244, %v178, %v280
        %vm283 = vcmp.eq.f32.partialorder %v163, 11.0
        %vm284 = vcmp.eq.f32.partialorder %v164, 11.0
        %v285 = vsel %vm283, %v195, 0.0
        %v286 = vsel %vm284, %v196, 0.0
        %v287 = vsel %vm273, %v193, %v285
        %v288 = vsel %vm274, %v194, %v286
        %v289 = vsel %vm263, %v185, %v287
        %v290 = vsel %vm264, %v186, %v288
        %v291 = vsel %vm253, %v177, %v289
        %v292 = vsel %vm254, %v178, %v290
        %vm293 = vcmp.eq.f32.partialorder %v163, 12.0
        %vm294 = vcmp.eq.f32.partialorder %v164, 12.0
        %v295 = vsel %vm293, %v195, 0.0
        %v296 = vsel %vm294, %v196, 0.0
        %v297 = vsel %vm283, %v193, %v295
        %v298 = vsel %vm284, %v194, %v296
        %v299 = vsel %vm273, %v185, %v297
        %v300 = vsel %vm274, %v186, %v298
        %v301 = vsel %vm263, %v177, %v299
        %v302 = vsel %vm264, %v178, %v300
        %v305 = vcombine.high %v211, %v211
        %v307 = vunpack.c.l.s4 1966171168
        %v308 = vunpack.c.0.s8 %v307
        %v309 = vlaneseq
        %v310 = vshrl.u32 %v309, 7
        %v311 = vsub.s32 %v308, %v310
        %v312 = vrot.slane %v211, %v311
        %v314 = vunpack.c.l.s4 1966171168
        %v315 = vunpack.c.0.s8 %v314
        %v316 = vlaneseq
        %v317 = vshrl.u32 %v316, 7
        %v318 = vsub.s32 %v315, %v317
        %v319 = vrot.slane %v305, %v318
        %v320 = vcombine.high %v312, %v312
        %v321 = vcombine.high %v319, %v319
        %v323 = vunpack.c.l.s4 1966171168
        %v324 = vunpack.c.0.s8 %v323
        %v325 = vlaneseq
        %v326 = vshrl.u32 %v325, 7
        %v327 = vsub.s32 %v324, %v326
        %v328 = vrot.slane %v312, %v327
        %v330 = vunpack.c.l.s4 1966171168
        %v331 = vunpack.c.0.s8 %v330
        %v332 = vlaneseq
        %v333 = vshrl.u32 %v332, 7
        %v334 = vsub.s32 %v331, %v333
        %v335 = vrot.slane %v319, %v334
        %v337 = vunpack.c.l.s4 1966171168
        %v338 = vunpack.c.0.s8 %v337
        %v339 = vlaneseq
        %v340 = vshrl.u32 %v339, 7
        %v341 = vsub.s32 %v338, %v340
        %v342 = vrot.slane %v320, %v341
        %v344 = vunpack.c.l.s4 1966171168
        %v345 = vunpack.c.0.s8 %v344
        %v346 = vlaneseq
        %v347 = vshrl.u32 %v346, 7
        %v348 = vsub.s32 %v345, %v347
        %v349 = vrot.slane %v321, %v348
        %v350 = vcombine.high %v328, %v328
        %v351 = vcombine.high %v335, %v335
        %v352 = vcombine.high %v342, %v342
        %v353 = vcombine.high %v349, %v349
        %v354 = vcombine.high %v212, %v212
        %v356 = vunpack.c.l.s4 1966171168
        %v357 = vunpack.c.0.s8 %v356
        %v358 = vlaneseq
        %v359 = vshrl.u32 %v358, 7
        %v360 = vsub.s32 %v357, %v359
        %v361 = vrot.slane %v212, %v360
        %v363 = vunpack.c.l.s4 1966171168
        %v364 = vunpack.c.0.s8 %v363
        %v365 = vlaneseq
        %v366 = vshrl.u32 %v365, 7
        %v367 = vsub.s32 %v364, %v366
        %v368 = vrot.slane %v354, %v367
        %v369 = vcombine.high %v361, %v361
        %v370 = vcombine.high %v368, %v368
        %v372 = vunpack.c.l.s4 1966171168
        %v373 = vunpack.c.0.s8 %v372
        %v374 = vlaneseq
        %v375 = vshrl.u32 %v374, 7
        %v376 = vsub.s32 %v373, %v375
        %v377 = vrot.slane %v361, %v376
        %v379 = vunpack.c.l.s4 1966171168
        %v380 = vunpack.c.0.s8 %v379
        %v381 = vlaneseq
        %v382 = vshrl.u32 %v381, 7
        %v383 = vsub.s32 %v380, %v382
        %v384 = vrot.slane %v368, %v383
        %v386 = vunpack.c.l.s4 1966171168
        %v387 = vunpack.c.0.s8 %v386
        %v388 = vlaneseq
        %v389 = vshrl.u32 %v388, 7
        %v390 = vsub.s32 %v387, %v389
        %v391 = vrot.slane %v369, %v390
        %v393 = vunpack.c.l.s4 1966171168
        %v394 = vunpack.c.0.s8 %v393
        %v395 = vlaneseq
        %v396 = vshrl.u32 %v395, 7
        %v397 = vsub.s32 %v394, %v396
        %v398 = vrot.slane %v370, %v397
        %v399 = vcombine.high %v377, %v377
        %v400 = vcombine.high %v384, %v384
        %v401 = vcombine.high %v391, %v391
        %v402 = vcombine.high %v398, %v398
        %v421 = vcombine.high %v221, %v221
        %v423 = vunpack.c.l.s4 1966171168
        %v424 = vunpack.c.0.s8 %v423
        %v425 = vlaneseq
        %v426 = vshrl.u32 %v425, 7
        %v427 = vsub.s32 %v424, %v426
        %v428 = vrot.slane %v221, %v427
        %v430 = vunpack.c.l.s4 1966171168
        %v431 = vunpack.c.0.s8 %v430
        %v432 = vlaneseq
        %v433 = vshrl.u32 %v432, 7
        %v434 = vsub.s32 %v431, %v433
        %v435 = vrot.slane %v421, %v434
        %v436 = vcombine.high %v428, %v428
        %v437 = vcombine.high %v435, %v435
        %v439 = vunpack.c.l.s4 1966171168
        %v440 = vunpack.c.0.s8 %v439
        %v441 = vlaneseq
        %v442 = vshrl.u32 %v441, 7
        %v443 = vsub.s32 %v440, %v442
        %v444 = vrot.slane %v428, %v443
        %v446 = vunpack.c.l.s4 1966171168
        %v447 = vunpack.c.0.s8 %v446
        %v448 = vlaneseq
        %v449 = vshrl.u32 %v448, 7
        %v450 = vsub.s32 %v447, %v449
        %v451 = vrot.slane %v435, %v450
        %v453 = vunpack.c.l.s4 1966171168
        %v454 = vunpack.c.0.s8 %v453
        %v455 = vlaneseq
        %v456 = vshrl.u32 %v455, 7
        %v457 = vsub.s32 %v454, %v456
        %v458 = vrot.slane %v436, %v457
        %v460 = vunpack.c.l.s4 1966171168
        %v461 = vunpack.c.0.s8 %v460
        %v462 = vlaneseq
        %v463 = vshrl.u32 %v462, 7
        %v464 = vsub.s32 %v461, %v463
        %v465 = vrot.slane %v437, %v464
        %v466 = vcombine.high %v444, %v444
        %v467 = vcombine.high %v451, %v451
        %v468 = vcombine.high %v458, %v458
        %v469 = vcombine.high %v465, %v465
        %v470 = vcombine.high %v222, %v222
        %v472 = vunpack.c.l.s4 1966171168
        %v473 = vunpack.c.0.s8 %v472
        %v474 = vlaneseq
        %v475 = vshrl.u32 %v474, 7
        %v476 = vsub.s32 %v473, %v475
        %v477 = vrot.slane %v222, %v476
        %v479 = vunpack.c.l.s4 1966171168
        %v480 = vunpack.c.0.s8 %v479
        %v481 = vlaneseq
        %v482 = vshrl.u32 %v481, 7
        %v483 = vsub.s32 %v480, %v482
        %v484 = vrot.slane %v470, %v483
        %v485 = vcombine.high %v477, %v477
        %v486 = vcombine.high %v484, %v484
        %v488 = vunpack.c.l.s4 1966171168
        %v489 = vunpack.c.0.s8 %v488
        %v490 = vlaneseq
        %v491 = vshrl.u32 %v490, 7
        %v492 = vsub.s32 %v489, %v491
        %v493 = vrot.slane %v477, %v492
        %v495 = vunpack.c.l.s4 1966171168
        %v496 = vunpack.c.0.s8 %v495
        %v497 = vlaneseq
        %v498 = vshrl.u32 %v497, 7
        %v499 = vsub.s32 %v496, %v498
        %v500 = vrot.slane %v484, %v499
        %v502 = vunpack.c.l.s4 1966171168
        %v503 = vunpack.c.0.s8 %v502
        %v504 = vlaneseq
        %v505 = vshrl.u32 %v504, 7
        %v506 = vsub.s32 %v503, %v505
        %v507 = vrot.slane %v485, %v506
        %v509 = vunpack.c.l.s4 1966171168
        %v510 = vunpack.c.0.s8 %v509
        %v511 = vlaneseq
        %v512 = vshrl.u32 %v511, 7
        %v513 = vsub.s32 %v510, %v512
        %v514 = vrot.slane %v486, %v513
        %v515 = vcombine.high %v493, %v493
        %v516 = vcombine.high %v500, %v500
        %v517 = vcombine.high %v507, %v507
        %v518 = vcombine.high %v514, %v514
        %v521 = vcombine.high %v231, %v231
        %v523 = vunpack.c.l.s4 1966171168
        %v524 = vunpack.c.0.s8 %v523
        %v525 = vlaneseq
        %v526 = vshrl.u32 %v525, 7
        %v527 = vsub.s32 %v524, %v526
        %v528 = vrot.slane %v231, %v527
        %v530 = vunpack.c.l.s4 1966171168
        %v531 = vunpack.c.0.s8 %v530
        %v532 = vlaneseq
        %v533 = vshrl.u32 %v532, 7
        %v534 = vsub.s32 %v531, %v533
        %v535 = vrot.slane %v521, %v534
        %v536 = vcombine.high %v528, %v528
        %v537 = vcombine.high %v535, %v535
        %v539 = vunpack.c.l.s4 1966171168
        %v540 = vunpack.c.0.s8 %v539
        %v541 = vlaneseq
        %v542 = vshrl.u32 %v541, 7
        %v543 = vsub.s32 %v540, %v542
        %v544 = vrot.slane %v528, %v543
        %v546 = vunpack.c.l.s4 1966171168
        %v547 = vunpack.c.0.s8 %v546
        %v548 = vlaneseq
        %v549 = vshrl.u32 %v548, 7
        %v550 = vsub.s32 %v547, %v549
        %v551 = vrot.slane %v535, %v550
        %v553 = vunpack.c.l.s4 1966171168
        %v554 = vunpack.c.0.s8 %v553
        %v555 = vlaneseq
        %v556 = vshrl.u32 %v555, 7
        %v557 = vsub.s32 %v554, %v556
        %v558 = vrot.slane %v536, %v557
        %v560 = vunpack.c.l.s4 1966171168
        %v561 = vunpack.c.0.s8 %v560
        %v562 = vlaneseq
        %v563 = vshrl.u32 %v562, 7
        %v564 = vsub.s32 %v561, %v563
        %v565 = vrot.slane %v537, %v564
        %v566 = vcombine.high %v544, %v544
        %v567 = vcombine.high %v551, %v551
        %v568 = vcombine.high %v558, %v558
        %v569 = vcombine.high %v565, %v565
        %v570 = vcombine.high %v232, %v232
        %v572 = vunpack.c.l.s4 1966171168
        %v573 = vunpack.c.0.s8 %v572
        %v574 = vlaneseq
        %v575 = vshrl.u32 %v574, 7
        %v576 = vsub.s32 %v573, %v575
        %v577 = vrot.slane %v232, %v576
        %v579 = vunpack.c.l.s4 1966171168
        %v580 = vunpack.c.0.s8 %v579
        %v581 = vlaneseq
        %v582 = vshrl.u32 %v581, 7
        %v583 = vsub.s32 %v580, %v582
        %v584 = vrot.slane %v570, %v583
        %v585 = vcombine.high %v577, %v577
        %v586 = vcombine.high %v584, %v584
        %v588 = vunpack.c.l.s4 1966171168
        %v589 = vunpack.c.0.s8 %v588
        %v590 = vlaneseq
        %v591 = vshrl.u32 %v590, 7
        %v592 = vsub.s32 %v589, %v591
        %v593 = vrot.slane %v577, %v592
        %v595 = vunpack.c.l.s4 1966171168
        %v596 = vunpack.c.0.s8 %v595
        %v597 = vlaneseq
        %v598 = vshrl.u32 %v597, 7
        %v599 = vsub.s32 %v596, %v598
        %v600 = vrot.slane %v584, %v599
        %v602 = vunpack.c.l.s4 1966171168
        %v603 = vunpack.c.0.s8 %v602
        %v604 = vlaneseq
        %v605 = vshrl.u32 %v604, 7
        %v606 = vsub.s32 %v603, %v605
        %v607 = vrot.slane %v585, %v606
        %v609 = vunpack.c.l.s4 1966171168
        %v610 = vunpack.c.0.s8 %v609
        %v611 = vlaneseq
        %v612 = vshrl.u32 %v611, 7
        %v613 = vsub.s32 %v610, %v612
        %v614 = vrot.slane %v586, %v613
        %v615 = vcombine.high %v593, %v593
        %v616 = vcombine.high %v600, %v600
        %v617 = vcombine.high %v607, %v607
        %v618 = vcombine.high %v614, %v614
        %v621 = vcombine.high %v241, %v241
        %v623 = vunpack.c.l.s4 1966171168
        %v624 = vunpack.c.0.s8 %v623
        %v625 = vlaneseq
        %v626 = vshrl.u32 %v625, 7
        %v627 = vsub.s32 %v624, %v626
        %v628 = vrot.slane %v241, %v627
        %v630 = vunpack.c.l.s4 1966171168
        %v631 = vunpack.c.0.s8 %v630
        %v632 = vlaneseq
        %v633 = vshrl.u32 %v632, 7
        %v634 = vsub.s32 %v631, %v633
        %v635 = vrot.slane %v621, %v634
        %v636 = vcombine.high %v628, %v628
        %v637 = vcombine.high %v635, %v635
        %v639 = vunpack.c.l.s4 1966171168
        %v640 = vunpack.c.0.s8 %v639
        %v641 = vlaneseq
        %v642 = vshrl.u32 %v641, 7
        %v643 = vsub.s32 %v640, %v642
        %v644 = vrot.slane %v628, %v643
        %v646 = vunpack.c.l.s4 1966171168
        %v647 = vunpack.c.0.s8 %v646
        %v648 = vlaneseq
        %v649 = vshrl.u32 %v648, 7
        %v650 = vsub.s32 %v647, %v649
        %v651 = vrot.slane %v635, %v650
        %v653 = vunpack.c.l.s4 1966171168
        %v654 = vunpack.c.0.s8 %v653
        %v655 = vlaneseq
        %v656 = vshrl.u32 %v655, 7
        %v657 = vsub.s32 %v654, %v656
        %v658 = vrot.slane %v636, %v657
        %v660 = vunpack.c.l.s4 1966171168
        %v661 = vunpack.c.0.s8 %v660
        %v662 = vlaneseq
        %v663 = vshrl.u32 %v662, 7
        %v664 = vsub.s32 %v661, %v663
        %v665 = vrot.slane %v637, %v664
        %v666 = vcombine.high %v644, %v644
        %v667 = vcombine.high %v651, %v651
        %v668 = vcombine.high %v658, %v658
        %v669 = vcombine.high %v665, %v665
        %v670 = vcombine.high %v242, %v242
        %v672 = vunpack.c.l.s4 1966171168
        %v673 = vunpack.c.0.s8 %v672
        %v674 = vlaneseq
        %v675 = vshrl.u32 %v674, 7
        %v676 = vsub.s32 %v673, %v675
        %v677 = vrot.slane %v242, %v676
        %v679 = vunpack.c.l.s4 1966171168
        %v680 = vunpack.c.0.s8 %v679
        %v681 = vlaneseq
        %v682 = vshrl.u32 %v681, 7
        %v683 = vsub.s32 %v680, %v682
        %v684 = vrot.slane %v670, %v683
        %v685 = vcombine.high %v677, %v677
        %v686 = vcombine.high %v684, %v684
        %v688 = vunpack.c.l.s4 1966171168
        %v689 = vunpack.c.0.s8 %v688
        %v690 = vlaneseq
        %v691 = vshrl.u32 %v690, 7
        %v692 = vsub.s32 %v689, %v691
        %v693 = vrot.slane %v677, %v692
        %v695 = vunpack.c.l.s4 1966171168
        %v696 = vunpack.c.0.s8 %v695
        %v697 = vlaneseq
        %v698 = vshrl.u32 %v697, 7
        %v699 = vsub.s32 %v696, %v698
        %v700 = vrot.slane %v684, %v699
        %v702 = vunpack.c.l.s4 1966171168
        %v703 = vunpack.c.0.s8 %v702
        %v704 = vlaneseq
        %v705 = vshrl.u32 %v704, 7
        %v706 = vsub.s32 %v703, %v705
        %v707 = vrot.slane %v685, %v706
        %v709 = vunpack.c.l.s4 1966171168
        %v710 = vunpack.c.0.s8 %v709
        %v711 = vlaneseq
        %v712 = vshrl.u32 %v711, 7
        %v713 = vsub.s32 %v710, %v712
        %v714 = vrot.slane %v686, %v713
        %v715 = vcombine.high %v693, %v693
        %v716 = vcombine.high %v700, %v700
        %v717 = vcombine.high %v707, %v707
        %v718 = vcombine.high %v714, %v714
        %v721 = vcombine.high %v251, %v251
        %v723 = vunpack.c.l.s4 1966171168
        %v724 = vunpack.c.0.s8 %v723
        %v725 = vlaneseq
        %v726 = vshrl.u32 %v725, 7
        %v727 = vsub.s32 %v724, %v726
        %v728 = vrot.slane %v251, %v727
        %v730 = vunpack.c.l.s4 1966171168
        %v731 = vunpack.c.0.s8 %v730
        %v732 = vlaneseq
        %v733 = vshrl.u32 %v732, 7
        %v734 = vsub.s32 %v731, %v733
        %v735 = vrot.slane %v721, %v734
        %v736 = vcombine.high %v728, %v728
        %v737 = vcombine.high %v735, %v735
        %v739 = vunpack.c.l.s4 1966171168
        %v740 = vunpack.c.0.s8 %v739
        %v741 = vlaneseq
        %v742 = vshrl.u32 %v741, 7
        %v743 = vsub.s32 %v740, %v742
        %v744 = vrot.slane %v728, %v743
        %v746 = vunpack.c.l.s4 1966171168
        %v747 = vunpack.c.0.s8 %v746
        %v748 = vlaneseq
        %v749 = vshrl.u32 %v748, 7
        %v750 = vsub.s32 %v747, %v749
        %v751 = vrot.slane %v735, %v750
        %v753 = vunpack.c.l.s4 1966171168
        %v754 = vunpack.c.0.s8 %v753
        %v755 = vlaneseq
        %v756 = vshrl.u32 %v755, 7
        %v757 = vsub.s32 %v754, %v756
        %v758 = vrot.slane %v736, %v757
        %v760 = vunpack.c.l.s4 1966171168
        %v761 = vunpack.c.0.s8 %v760
        %v762 = vlaneseq
        %v763 = vshrl.u32 %v762, 7
        %v764 = vsub.s32 %v761, %v763
        %v765 = vrot.slane %v737, %v764
        %v766 = vcombine.high %v744, %v744
        %v767 = vcombine.high %v751, %v751
        %v768 = vcombine.high %v758, %v758
        %v769 = vcombine.high %v765, %v765
        %v770 = vcombine.high %v252, %v252
        %v772 = vunpack.c.l.s4 1966171168
        %v773 = vunpack.c.0.s8 %v772
        %v774 = vlaneseq
        %v775 = vshrl.u32 %v774, 7
        %v776 = vsub.s32 %v773, %v775
        %v777 = vrot.slane %v252, %v776
        %v779 = vunpack.c.l.s4 1966171168
        %v780 = vunpack.c.0.s8 %v779
        %v781 = vlaneseq
        %v782 = vshrl.u32 %v781, 7
        %v783 = vsub.s32 %v780, %v782
        %v784 = vrot.slane %v770, %v783
        %v785 = vcombine.high %v777, %v777
        %v786 = vcombine.high %v784, %v784
        %v788 = vunpack.c.l.s4 1966171168
        %v789 = vunpack.c.0.s8 %v788
        %v790 = vlaneseq
        %v791 = vshrl.u32 %v790, 7
        %v792 = vsub.s32 %v789, %v791
        %v793 = vrot.slane %v777, %v792
        %v795 = vunpack.c.l.s4 1966171168
        %v796 = vunpack.c.0.s8 %v795
        %v797 = vlaneseq
        %v798 = vshrl.u32 %v797, 7
        %v799 = vsub.s32 %v796, %v798
        %v800 = vrot.slane %v784, %v799
        %v802 = vunpack.c.l.s4 1966171168
        %v803 = vunpack.c.0.s8 %v802
        %v804 = vlaneseq
        %v805 = vshrl.u32 %v804, 7
        %v806 = vsub.s32 %v803, %v805
        %v807 = vrot.slane %v785, %v806
        %v809 = vunpack.c.l.s4 1966171168
        %v810 = vunpack.c.0.s8 %v809
        %v811 = vlaneseq
        %v812 = vshrl.u32 %v811, 7
        %v813 = vsub.s32 %v810, %v812
        %v814 = vrot.slane %v786, %v813
        %v815 = vcombine.high %v793, %v793
        %v816 = vcombine.high %v800, %v800
        %v817 = vcombine.high %v807, %v807
        %v818 = vcombine.high %v814, %v814
        %v821 = vcombine.high %v261, %v261
        %v823 = vunpack.c.l.s4 1966171168
        %v824 = vunpack.c.0.s8 %v823
        %v825 = vlaneseq
        %v826 = vshrl.u32 %v825, 7
        %v827 = vsub.s32 %v824, %v826
        %v828 = vrot.slane %v261, %v827
        %v830 = vunpack.c.l.s4 1966171168
        %v831 = vunpack.c.0.s8 %v830
        %v832 = vlaneseq
        %v833 = vshrl.u32 %v832, 7
        %v834 = vsub.s32 %v831, %v833
        %v835 = vrot.slane %v821, %v834
        %v836 = vcombine.high %v828, %v828
        %v837 = vcombine.high %v835, %v835
        %v839 = vunpack.c.l.s4 1966171168
        %v840 = vunpack.c.0.s8 %v839
        %v841 = vlaneseq
        %v842 = vshrl.u32 %v841, 7
        %v843 = vsub.s32 %v840, %v842
        %v844 = vrot.slane %v828, %v843
        %v846 = vunpack.c.l.s4 1966171168
        %v847 = vunpack.c.0.s8 %v846
        %v848 = vlaneseq
        %v849 = vshrl.u32 %v848, 7
        %v850 = vsub.s32 %v847, %v849
        %v851 = vrot.slane %v835, %v850
        %v853 = vunpack.c.l.s4 1966171168
        %v854 = vunpack.c.0.s8 %v853
        %v855 = vlaneseq
        %v856 = vshrl.u32 %v855, 7
        %v857 = vsub.s32 %v854, %v856
        %v858 = vrot.slane %v836, %v857
        %v860 = vunpack.c.l.s4 1966171168
        %v861 = vunpack.c.0.s8 %v860
        %v862 = vlaneseq
        %v863 = vshrl.u32 %v862, 7
        %v864 = vsub.s32 %v861, %v863
        %v865 = vrot.slane %v837, %v864
        %v866 = vcombine.high %v844, %v844
        %v867 = vcombine.high %v851, %v851
        %v868 = vcombine.high %v858, %v858
        %v869 = vcombine.high %v865, %v865
        %v870 = vcombine.high %v262, %v262
        %v872 = vunpack.c.l.s4 1966171168
        %v873 = vunpack.c.0.s8 %v872
        %v874 = vlaneseq
        %v875 = vshrl.u32 %v874, 7
        %v876 = vsub.s32 %v873, %v875
        %v877 = vrot.slane %v262, %v876
        %v879 = vunpack.c.l.s4 1966171168
        %v880 = vunpack.c.0.s8 %v879
        %v881 = vlaneseq
        %v882 = vshrl.u32 %v881, 7
        %v883 = vsub.s32 %v880, %v882
        %v884 = vrot.slane %v870, %v883
        %v885 = vcombine.high %v877, %v877
        %v886 = vcombine.high %v884, %v884
        %v888 = vunpack.c.l.s4 1966171168
        %v889 = vunpack.c.0.s8 %v888
        %v890 = vlaneseq
        %v891 = vshrl.u32 %v890, 7
        %v892 = vsub.s32 %v889, %v891
        %v893 = vrot.slane %v877, %v892
        %v895 = vunpack.c.l.s4 1966171168
        %v896 = vunpack.c.0.s8 %v895
        %v897 = vlaneseq
        %v898 = vshrl.u32 %v897, 7
        %v899 = vsub.s32 %v896, %v898
        %v900 = vrot.slane %v884, %v899
        %v902 = vunpack.c.l.s4 1966171168
        %v903 = vunpack.c.0.s8 %v902
        %v904 = vlaneseq
        %v905 = vshrl.u32 %v904, 7
        %v906 = vsub.s32 %v903, %v905
        %v907 = vrot.slane %v885, %v906
        %v909 = vunpack.c.l.s4 1966171168
        %v910 = vunpack.c.0.s8 %v909
        %v911 = vlaneseq
        %v912 = vshrl.u32 %v911, 7
        %v913 = vsub.s32 %v910, %v912
        %v914 = vrot.slane %v886, %v913
        %v915 = vcombine.high %v893, %v893
        %v916 = vcombine.high %v900, %v900
        %v917 = vcombine.high %v907, %v907
        %v918 = vcombine.high %v914, %v914
        %v921 = vcombine.high %v271, %v271
        %v923 = vunpack.c.l.s4 1966171168
        %v924 = vunpack.c.0.s8 %v923
        %v925 = vlaneseq
        %v926 = vshrl.u32 %v925, 7
        %v927 = vsub.s32 %v924, %v926
        %v928 = vrot.slane %v271, %v927
        %v930 = vunpack.c.l.s4 1966171168
        %v931 = vunpack.c.0.s8 %v930
        %v932 = vlaneseq
        %v933 = vshrl.u32 %v932, 7
        %v934 = vsub.s32 %v931, %v933
        %v935 = vrot.slane %v921, %v934
        %v936 = vcombine.high %v928, %v928
        %v937 = vcombine.high %v935, %v935
        %v939 = vunpack.c.l.s4 1966171168
        %v940 = vunpack.c.0.s8 %v939
        %v941 = vlaneseq
        %v942 = vshrl.u32 %v941, 7
        %v943 = vsub.s32 %v940, %v942
        %v944 = vrot.slane %v928, %v943
        %v946 = vunpack.c.l.s4 1966171168
        %v947 = vunpack.c.0.s8 %v946
        %v948 = vlaneseq
        %v949 = vshrl.u32 %v948, 7
        %v950 = vsub.s32 %v947, %v949
        %v951 = vrot.slane %v935, %v950
        %v953 = vunpack.c.l.s4 1966171168
        %v954 = vunpack.c.0.s8 %v953
        %v955 = vlaneseq
        %v956 = vshrl.u32 %v955, 7
        %v957 = vsub.s32 %v954, %v956
        %v958 = vrot.slane %v936, %v957
        %v960 = vunpack.c.l.s4 1966171168
        %v961 = vunpack.c.0.s8 %v960
        %v962 = vlaneseq
        %v963 = vshrl.u32 %v962, 7
        %v964 = vsub.s32 %v961, %v963
        %v965 = vrot.slane %v937, %v964
        %v966 = vcombine.high %v944, %v944
        %v967 = vcombine.high %v951, %v951
        %v968 = vcombine.high %v958, %v958
        %v969 = vcombine.high %v965, %v965
        %v970 = vcombine.high %v272, %v272
        %v972 = vunpack.c.l.s4 1966171168
        %v973 = vunpack.c.0.s8 %v972
        %v974 = vlaneseq
        %v975 = vshrl.u32 %v974, 7
        %v976 = vsub.s32 %v973, %v975
        %v977 = vrot.slane %v272, %v976
        %v979 = vunpack.c.l.s4 1966171168
        %v980 = vunpack.c.0.s8 %v979
        %v981 = vlaneseq
        %v982 = vshrl.u32 %v981, 7
        %v983 = vsub.s32 %v980, %v982
        %v984 = vrot.slane %v970, %v983
        %v985 = vcombine.high %v977, %v977
        %v986 = vcombine.high %v984, %v984
        %v988 = vunpack.c.l.s4 1966171168
        %v989 = vunpack.c.0.s8 %v988
        %v990 = vlaneseq
        %v991 = vshrl.u32 %v990, 7
        %v992 = vsub.s32 %v989, %v991
        %v993 = vrot.slane %v977, %v992
        %v995 = vunpack.c.l.s4 1966171168
        %v996 = vunpack.c.0.s8 %v995
        %v997 = vlaneseq
        %v998 = vshrl.u32 %v997, 7
        %v999 = vsub.s32 %v996, %v998
        %v1000 = vrot.slane %v984, %v999
        %v1002 = vunpack.c.l.s4 1966171168
        %v1003 = vunpack.c.0.s8 %v1002
        %v1004 = vlaneseq
        %v1005 = vshrl.u32 %v1004, 7
        %v1006 = vsub.s32 %v1003, %v1005
        %v1007 = vrot.slane %v985, %v1006
        %v1009 = vunpack.c.l.s4 1966171168
        %v1010 = vunpack.c.0.s8 %v1009
        %v1011 = vlaneseq
        %v1012 = vshrl.u32 %v1011, 7
        %v1013 = vsub.s32 %v1010, %v1012
        %v1014 = vrot.slane %v986, %v1013
        %v1015 = vcombine.high %v993, %v993
        %v1016 = vcombine.high %v1000, %v1000
        %v1017 = vcombine.high %v1007, %v1007
        %v1018 = vcombine.high %v1014, %v1014
        %v1021 = vcombine.high %v281, %v281
        %v1023 = vunpack.c.l.s4 1966171168
        %v1024 = vunpack.c.0.s8 %v1023
        %v1025 = vlaneseq
        %v1026 = vshrl.u32 %v1025, 7
        %v1027 = vsub.s32 %v1024, %v1026
        %v1028 = vrot.slane %v281, %v1027
        %v1030 = vunpack.c.l.s4 1966171168
        %v1031 = vunpack.c.0.s8 %v1030
        %v1032 = vlaneseq
        %v1033 = vshrl.u32 %v1032, 7
        %v1034 = vsub.s32 %v1031, %v1033
        %v1035 = vrot.slane %v1021, %v1034
        %v1036 = vcombine.high %v1028, %v1028
        %v1037 = vcombine.high %v1035, %v1035
        %v1039 = vunpack.c.l.s4 1966171168
        %v1040 = vunpack.c.0.s8 %v1039
        %v1041 = vlaneseq
        %v1042 = vshrl.u32 %v1041, 7
        %v1043 = vsub.s32 %v1040, %v1042
        %v1044 = vrot.slane %v1028, %v1043
        %v1046 = vunpack.c.l.s4 1966171168
        %v1047 = vunpack.c.0.s8 %v1046
        %v1048 = vlaneseq
        %v1049 = vshrl.u32 %v1048, 7
        %v1050 = vsub.s32 %v1047, %v1049
        %v1051 = vrot.slane %v1035, %v1050
        %v1053 = vunpack.c.l.s4 1966171168
        %v1054 = vunpack.c.0.s8 %v1053
        %v1055 = vlaneseq
        %v1056 = vshrl.u32 %v1055, 7
        %v1057 = vsub.s32 %v1054, %v1056
        %v1058 = vrot.slane %v1036, %v1057
        %v1060 = vunpack.c.l.s4 1966171168
        %v1061 = vunpack.c.0.s8 %v1060
        %v1062 = vlaneseq
        %v1063 = vshrl.u32 %v1062, 7
        %v1064 = vsub.s32 %v1061, %v1063
        %v1065 = vrot.slane %v1037, %v1064
        %v1066 = vcombine.high %v1044, %v1044
        %v1067 = vcombine.high %v1051, %v1051
        %v1068 = vcombine.high %v1058, %v1058
        %v1069 = vcombine.high %v1065, %v1065
        %v1070 = vcombine.high %v282, %v282
        %v1072 = vunpack.c.l.s4 1966171168
        %v1073 = vunpack.c.0.s8 %v1072
        %v1074 = vlaneseq
        %v1075 = vshrl.u32 %v1074, 7
        %v1076 = vsub.s32 %v1073, %v1075
        %v1077 = vrot.slane %v282, %v1076
        %v1079 = vunpack.c.l.s4 1966171168
        %v1080 = vunpack.c.0.s8 %v1079
        %v1081 = vlaneseq
        %v1082 = vshrl.u32 %v1081, 7
        %v1083 = vsub.s32 %v1080, %v1082
        %v1084 = vrot.slane %v1070, %v1083
        %v1085 = vcombine.high %v1077, %v1077
        %v1086 = vcombine.high %v1084, %v1084
        %v1088 = vunpack.c.l.s4 1966171168
        %v1089 = vunpack.c.0.s8 %v1088
        %v1090 = vlaneseq
        %v1091 = vshrl.u32 %v1090, 7
        %v1092 = vsub.s32 %v1089, %v1091
        %v1093 = vrot.slane %v1077, %v1092
        %v1095 = vunpack.c.l.s4 1966171168
        %v1096 = vunpack.c.0.s8 %v1095
        %v1097 = vlaneseq
        %v1098 = vshrl.u32 %v1097, 7
        %v1099 = vsub.s32 %v1096, %v1098
        %v1100 = vrot.slane %v1084, %v1099
        %v1102 = vunpack.c.l.s4 1966171168
        %v1103 = vunpack.c.0.s8 %v1102
        %v1104 = vlaneseq
        %v1105 = vshrl.u32 %v1104, 7
        %v1106 = vsub.s32 %v1103, %v1105
        %v1107 = vrot.slane %v1085, %v1106
        %v1109 = vunpack.c.l.s4 1966171168
        %v1110 = vunpack.c.0.s8 %v1109
        %v1111 = vlaneseq
        %v1112 = vshrl.u32 %v1111, 7
        %v1113 = vsub.s32 %v1110, %v1112
        %v1114 = vrot.slane %v1086, %v1113
        %v1115 = vcombine.high %v1093, %v1093
        %v1116 = vcombine.high %v1100, %v1100
        %v1117 = vcombine.high %v1107, %v1107
        %v1118 = vcombine.high %v1114, %v1114
        %v1121 = vcombine.high %v291, %v291
        %v1123 = vunpack.c.l.s4 1966171168
        %v1124 = vunpack.c.0.s8 %v1123
        %v1125 = vlaneseq
        %v1126 = vshrl.u32 %v1125, 7
        %v1127 = vsub.s32 %v1124, %v1126
        %v1128 = vrot.slane %v291, %v1127
        %v1130 = vunpack.c.l.s4 1966171168
        %v1131 = vunpack.c.0.s8 %v1130
        %v1132 = vlaneseq
        %v1133 = vshrl.u32 %v1132, 7
        %v1134 = vsub.s32 %v1131, %v1133
        %v1135 = vrot.slane %v1121, %v1134
        %v1136 = vcombine.high %v1128, %v1128
        %v1137 = vcombine.high %v1135, %v1135
        %v1139 = vunpack.c.l.s4 1966171168
        %v1140 = vunpack.c.0.s8 %v1139
        %v1141 = vlaneseq
        %v1142 = vshrl.u32 %v1141, 7
        %v1143 = vsub.s32 %v1140, %v1142
        %v1144 = vrot.slane %v1128, %v1143
        %v1146 = vunpack.c.l.s4 1966171168
        %v1147 = vunpack.c.0.s8 %v1146
        %v1148 = vlaneseq
        %v1149 = vshrl.u32 %v1148, 7
        %v1150 = vsub.s32 %v1147, %v1149
        %v1151 = vrot.slane %v1135, %v1150
        %v1153 = vunpack.c.l.s4 1966171168
        %v1154 = vunpack.c.0.s8 %v1153
        %v1155 = vlaneseq
        %v1156 = vshrl.u32 %v1155, 7
        %v1157 = vsub.s32 %v1154, %v1156
        %v1158 = vrot.slane %v1136, %v1157
        %v1160 = vunpack.c.l.s4 1966171168
        %v1161 = vunpack.c.0.s8 %v1160
        %v1162 = vlaneseq
        %v1163 = vshrl.u32 %v1162, 7
        %v1164 = vsub.s32 %v1161, %v1163
        %v1165 = vrot.slane %v1137, %v1164
        %v1166 = vcombine.high %v1144, %v1144
        %v1167 = vcombine.high %v1151, %v1151
        %v1168 = vcombine.high %v1158, %v1158
        %v1169 = vcombine.high %v1165, %v1165
        %v1170 = vcombine.high %v292, %v292
        %v1172 = vunpack.c.l.s4 1966171168
        %v1173 = vunpack.c.0.s8 %v1172
        %v1174 = vlaneseq
        %v1175 = vshrl.u32 %v1174, 7
        %v1176 = vsub.s32 %v1173, %v1175
        %v1177 = vrot.slane %v292, %v1176
        %v1179 = vunpack.c.l.s4 1966171168
        %v1180 = vunpack.c.0.s8 %v1179
        %v1181 = vlaneseq
        %v1182 = vshrl.u32 %v1181, 7
        %v1183 = vsub.s32 %v1180, %v1182
        %v1184 = vrot.slane %v1170, %v1183
        %v1185 = vcombine.high %v1177, %v1177
        %v1186 = vcombine.high %v1184, %v1184
        %v1188 = vunpack.c.l.s4 1966171168
        %v1189 = vunpack.c.0.s8 %v1188
        %v1190 = vlaneseq
        %v1191 = vshrl.u32 %v1190, 7
        %v1192 = vsub.s32 %v1189, %v1191
        %v1193 = vrot.slane %v1177, %v1192
        %v1195 = vunpack.c.l.s4 1966171168
        %v1196 = vunpack.c.0.s8 %v1195
        %v1197 = vlaneseq
        %v1198 = vshrl.u32 %v1197, 7
        %v1199 = vsub.s32 %v1196, %v1198
        %v1200 = vrot.slane %v1184, %v1199
        %v1202 = vunpack.c.l.s4 1966171168
        %v1203 = vunpack.c.0.s8 %v1202
        %v1204 = vlaneseq
        %v1205 = vshrl.u32 %v1204, 7
        %v1206 = vsub.s32 %v1203, %v1205
        %v1207 = vrot.slane %v1185, %v1206
        %v1209 = vunpack.c.l.s4 1966171168
        %v1210 = vunpack.c.0.s8 %v1209
        %v1211 = vlaneseq
        %v1212 = vshrl.u32 %v1211, 7
        %v1213 = vsub.s32 %v1210, %v1212
        %v1214 = vrot.slane %v1186, %v1213
        %v1215 = vcombine.high %v1193, %v1193
        %v1216 = vcombine.high %v1200, %v1200
        %v1217 = vcombine.high %v1207, %v1207
        %v1218 = vcombine.high %v1214, %v1214
        %v1237 = vcombine.high %v301, %v301
        %v1239 = vunpack.c.l.s4 1966171168
        %v1240 = vunpack.c.0.s8 %v1239
        %v1241 = vlaneseq
        %v1242 = vshrl.u32 %v1241, 7
        %v1243 = vsub.s32 %v1240, %v1242
        %v1244 = vrot.slane %v301, %v1243
        %v1246 = vunpack.c.l.s4 1966171168
        %v1247 = vunpack.c.0.s8 %v1246
        %v1248 = vlaneseq
        %v1249 = vshrl.u32 %v1248, 7
        %v1250 = vsub.s32 %v1247, %v1249
        %v1251 = vrot.slane %v1237, %v1250
        %v1252 = vcombine.high %v1244, %v1244
        %v1253 = vcombine.high %v1251, %v1251
        %v1255 = vunpack.c.l.s4 1966171168
        %v1256 = vunpack.c.0.s8 %v1255
        %v1257 = vlaneseq
        %v1258 = vshrl.u32 %v1257, 7
        %v1259 = vsub.s32 %v1256, %v1258
        %v1260 = vrot.slane %v1244, %v1259
        %v1262 = vunpack.c.l.s4 1966171168
        %v1263 = vunpack.c.0.s8 %v1262
        %v1264 = vlaneseq
        %v1265 = vshrl.u32 %v1264, 7
        %v1266 = vsub.s32 %v1263, %v1265
        %v1267 = vrot.slane %v1251, %v1266
        %v1269 = vunpack.c.l.s4 1966171168
        %v1270 = vunpack.c.0.s8 %v1269
        %v1271 = vlaneseq
        %v1272 = vshrl.u32 %v1271, 7
        %v1273 = vsub.s32 %v1270, %v1272
        %v1274 = vrot.slane %v1252, %v1273
        %v1276 = vunpack.c.l.s4 1966171168
        %v1277 = vunpack.c.0.s8 %v1276
        %v1278 = vlaneseq
        %v1279 = vshrl.u32 %v1278, 7
        %v1280 = vsub.s32 %v1277, %v1279
        %v1281 = vrot.slane %v1253, %v1280
        %v1282 = vcombine.high %v1260, %v1260
        %v1283 = vcombine.high %v1267, %v1267
        %v1284 = vcombine.high %v1274, %v1274
        %v1285 = vcombine.high %v1281, %v1281
        %v1286 = vcombine.high %v302, %v302
        %v1288 = vunpack.c.l.s4 1966171168
        %v1289 = vunpack.c.0.s8 %v1288
        %v1290 = vlaneseq
        %v1291 = vshrl.u32 %v1290, 7
        %v1292 = vsub.s32 %v1289, %v1291
        %v1293 = vrot.slane %v302, %v1292
        %v1295 = vunpack.c.l.s4 1966171168
        %v1296 = vunpack.c.0.s8 %v1295
        %v1297 = vlaneseq
        %v1298 = vshrl.u32 %v1297, 7
        %v1299 = vsub.s32 %v1296, %v1298
        %v1300 = vrot.slane %v1286, %v1299
        %v1301 = vcombine.high %v1293, %v1293
        %v1302 = vcombine.high %v1300, %v1300
        %v1304 = vunpack.c.l.s4 1966171168
        %v1305 = vunpack.c.0.s8 %v1304
        %v1306 = vlaneseq
        %v1307 = vshrl.u32 %v1306, 7
        %v1308 = vsub.s32 %v1305, %v1307
        %v1309 = vrot.slane %v1293, %v1308
        %v1311 = vunpack.c.l.s4 1966171168
        %v1312 = vunpack.c.0.s8 %v1311
        %v1313 = vlaneseq
        %v1314 = vshrl.u32 %v1313, 7
        %v1315 = vsub.s32 %v1312, %v1314
        %v1316 = vrot.slane %v1300, %v1315
        %v1318 = vunpack.c.l.s4 1966171168
        %v1319 = vunpack.c.0.s8 %v1318
        %v1320 = vlaneseq
        %v1321 = vshrl.u32 %v1320, 7
        %v1322 = vsub.s32 %v1319, %v1321
        %v1323 = vrot.slane %v1301, %v1322
        %v1325 = vunpack.c.l.s4 1966171168
        %v1326 = vunpack.c.0.s8 %v1325
        %v1327 = vlaneseq
        %v1328 = vshrl.u32 %v1327, 7
        %v1329 = vsub.s32 %v1326, %v1328
        %v1330 = vrot.slane %v1302, %v1329
        %v1331 = vcombine.high %v1309, %v1309
        %v1332 = vcombine.high %v1316, %v1316
        %v1333 = vcombine.high %v1323, %v1323
        %v1334 = vcombine.high %v1330, %v1330
        %v1335 = vlaneseq
        %v1336 = vshrl.u32 %v1335, 7
        %v1337 = vsub.s32 0, %v1336
        %v1338 = vrot.slane %v444, %v1337
        %v1339 = vlaneseq
        %v1340 = vshrl.u32 %v1339, 7
        %v1341 = vsub.s32 0, %v1340
        %v1342 = vrot.slane %v458, %v1341
        %v1343 = vlaneseq
        %v1344 = vshrl.u32 %v1343, 7
        %v1345 = vsub.s32 0, %v1344
        %v1346 = vrot.slane %v466, %v1345
        %v1347 = vlaneseq
        %v1348 = vshrl.u32 %v1347, 7
        %v1349 = vsub.s32 0, %v1348
        %v1350 = vrot.slane %v468, %v1349
        %v1351 = vlaneseq
        %v1352 = vshrl.u32 %v1351, 7
        %v1353 = vsub.s32 0, %v1352
        %v1354 = vrot.slane %v451, %v1353
        %v1355 = vlaneseq
        %v1356 = vshrl.u32 %v1355, 7
        %v1357 = vsub.s32 0, %v1356
        %v1358 = vrot.slane %v465, %v1357
        %v1359 = vlaneseq
        %v1360 = vshrl.u32 %v1359, 7
        %v1361 = vsub.s32 0, %v1360
        %v1362 = vrot.slane %v467, %v1361
        %v1363 = vlaneseq
        %v1364 = vshrl.u32 %v1363, 7
        %v1365 = vsub.s32 0, %v1364
        %v1366 = vrot.slane %v469, %v1365
        %v1367 = vlaneseq
        %v1368 = vshrl.u32 %v1367, 7
        %v1369 = vsub.s32 0, %v1368
        %v1370 = vrot.slane %v493, %v1369
        %v1371 = vlaneseq
        %v1372 = vshrl.u32 %v1371, 7
        %v1373 = vsub.s32 0, %v1372
        %v1374 = vrot.slane %v507, %v1373
        %v1375 = vlaneseq
        %v1376 = vshrl.u32 %v1375, 7
        %v1377 = vsub.s32 0, %v1376
        %v1378 = vrot.slane %v515, %v1377
        %v1379 = vlaneseq
        %v1380 = vshrl.u32 %v1379, 7
        %v1381 = vsub.s32 0, %v1380
        %v1382 = vrot.slane %v517, %v1381
        %v1383 = vlaneseq
        %v1384 = vshrl.u32 %v1383, 7
        %v1385 = vsub.s32 0, %v1384
        %v1386 = vrot.slane %v500, %v1385
        %v1387 = vlaneseq
        %v1388 = vshrl.u32 %v1387, 7
        %v1389 = vsub.s32 0, %v1388
        %v1390 = vrot.slane %v514, %v1389
        %v1391 = vlaneseq
        %v1392 = vshrl.u32 %v1391, 7
        %v1393 = vsub.s32 0, %v1392
        %v1394 = vrot.slane %v516, %v1393
        %v1395 = vlaneseq
        %v1396 = vshrl.u32 %v1395, 7
        %v1397 = vsub.s32 0, %v1396
        %v1398 = vrot.slane %v518, %v1397
        %v1415 = vlaneseq
        %v1416 = vshrl.u32 %v1415, 7
        %v1417 = vsub.s32 0, %v1416
        %v1418 = vrot.slane %v544, %v1417
        %v1419 = vlaneseq
        %v1420 = vshrl.u32 %v1419, 7
        %v1421 = vsub.s32 0, %v1420
        %v1422 = vrot.slane %v558, %v1421
        %v1423 = vlaneseq
        %v1424 = vshrl.u32 %v1423, 7
        %v1425 = vsub.s32 0, %v1424
        %v1426 = vrot.slane %v566, %v1425
        %v1427 = vlaneseq
        %v1428 = vshrl.u32 %v1427, 7
        %v1429 = vsub.s32 0, %v1428
        %v1430 = vrot.slane %v568, %v1429
        %v1431 = vlaneseq
        %v1432 = vshrl.u32 %v1431, 7
        %v1433 = vsub.s32 0, %v1432
        %v1434 = vrot.slane %v551, %v1433
        %v1435 = vlaneseq
        %v1436 = vshrl.u32 %v1435, 7
        %v1437 = vsub.s32 0, %v1436
        %v1438 = vrot.slane %v565, %v1437
        %v1439 = vlaneseq
        %v1440 = vshrl.u32 %v1439, 7
        %v1441 = vsub.s32 0, %v1440
        %v1442 = vrot.slane %v567, %v1441
        %v1443 = vlaneseq
        %v1444 = vshrl.u32 %v1443, 7
        %v1445 = vsub.s32 0, %v1444
        %v1446 = vrot.slane %v569, %v1445
        %v1447 = vlaneseq
        %v1448 = vshrl.u32 %v1447, 7
        %v1449 = vsub.s32 0, %v1448
        %v1450 = vrot.slane %v593, %v1449
        %v1451 = vlaneseq
        %v1452 = vshrl.u32 %v1451, 7
        %v1453 = vsub.s32 0, %v1452
        %v1454 = vrot.slane %v607, %v1453
        %v1455 = vlaneseq
        %v1456 = vshrl.u32 %v1455, 7
        %v1457 = vsub.s32 0, %v1456
        %v1458 = vrot.slane %v615, %v1457
        %v1459 = vlaneseq
        %v1460 = vshrl.u32 %v1459, 7
        %v1461 = vsub.s32 0, %v1460
        %v1462 = vrot.slane %v617, %v1461
        %v1463 = vlaneseq
        %v1464 = vshrl.u32 %v1463, 7
        %v1465 = vsub.s32 0, %v1464
        %v1466 = vrot.slane %v600, %v1465
        %v1467 = vlaneseq
        %v1468 = vshrl.u32 %v1467, 7
        %v1469 = vsub.s32 0, %v1468
        %v1470 = vrot.slane %v614, %v1469
        %v1471 = vlaneseq
        %v1472 = vshrl.u32 %v1471, 7
        %v1473 = vsub.s32 0, %v1472
        %v1474 = vrot.slane %v616, %v1473
        %v1475 = vlaneseq
        %v1476 = vshrl.u32 %v1475, 7
        %v1477 = vsub.s32 0, %v1476
        %v1478 = vrot.slane %v618, %v1477
        %v1495 = vlaneseq
        %v1496 = vshrl.u32 %v1495, 7
        %v1497 = vsub.s32 0, %v1496
        %v1498 = vrot.slane %v644, %v1497
        %v1499 = vlaneseq
        %v1500 = vshrl.u32 %v1499, 7
        %v1501 = vsub.s32 0, %v1500
        %v1502 = vrot.slane %v658, %v1501
        %v1503 = vlaneseq
        %v1504 = vshrl.u32 %v1503, 7
        %v1505 = vsub.s32 0, %v1504
        %v1506 = vrot.slane %v666, %v1505
        %v1507 = vlaneseq
        %v1508 = vshrl.u32 %v1507, 7
        %v1509 = vsub.s32 0, %v1508
        %v1510 = vrot.slane %v668, %v1509
        %v1511 = vlaneseq
        %v1512 = vshrl.u32 %v1511, 7
        %v1513 = vsub.s32 0, %v1512
        %v1514 = vrot.slane %v651, %v1513
        %v1515 = vlaneseq
        %v1516 = vshrl.u32 %v1515, 7
        %v1517 = vsub.s32 0, %v1516
        %v1518 = vrot.slane %v665, %v1517
        %v1519 = vlaneseq
        %v1520 = vshrl.u32 %v1519, 7
        %v1521 = vsub.s32 0, %v1520
        %v1522 = vrot.slane %v667, %v1521
        %v1523 = vlaneseq
        %v1524 = vshrl.u32 %v1523, 7
        %v1525 = vsub.s32 0, %v1524
        %v1526 = vrot.slane %v669, %v1525
        %v1527 = vlaneseq
        %v1528 = vshrl.u32 %v1527, 7
        %v1529 = vsub.s32 0, %v1528
        %v1530 = vrot.slane %v693, %v1529
        %v1531 = vlaneseq
        %v1532 = vshrl.u32 %v1531, 7
        %v1533 = vsub.s32 0, %v1532
        %v1534 = vrot.slane %v707, %v1533
        %v1535 = vlaneseq
        %v1536 = vshrl.u32 %v1535, 7
        %v1537 = vsub.s32 0, %v1536
        %v1538 = vrot.slane %v715, %v1537
        %v1539 = vlaneseq
        %v1540 = vshrl.u32 %v1539, 7
        %v1541 = vsub.s32 0, %v1540
        %v1542 = vrot.slane %v717, %v1541
        %v1543 = vlaneseq
        %v1544 = vshrl.u32 %v1543, 7
        %v1545 = vsub.s32 0, %v1544
        %v1546 = vrot.slane %v700, %v1545
        %v1547 = vlaneseq
        %v1548 = vshrl.u32 %v1547, 7
        %v1549 = vsub.s32 0, %v1548
        %v1550 = vrot.slane %v714, %v1549
        %v1551 = vlaneseq
        %v1552 = vshrl.u32 %v1551, 7
        %v1553 = vsub.s32 0, %v1552
        %v1554 = vrot.slane %v716, %v1553
        %v1555 = vlaneseq
        %v1556 = vshrl.u32 %v1555, 7
        %v1557 = vsub.s32 0, %v1556
        %v1558 = vrot.slane %v718, %v1557
        %v1575 = vlaneseq
        %v1576 = vshrl.u32 %v1575, 7
        %v1577 = vsub.s32 0, %v1576
        %v1578 = vrot.slane %v744, %v1577
        %v1579 = vlaneseq
        %v1580 = vshrl.u32 %v1579, 7
        %v1581 = vsub.s32 0, %v1580
        %v1582 = vrot.slane %v758, %v1581
        %v1583 = vlaneseq
        %v1584 = vshrl.u32 %v1583, 7
        %v1585 = vsub.s32 0, %v1584
        %v1586 = vrot.slane %v766, %v1585
        %v1587 = vlaneseq
        %v1588 = vshrl.u32 %v1587, 7
        %v1589 = vsub.s32 0, %v1588
        %v1590 = vrot.slane %v768, %v1589
        %v1591 = vlaneseq
        %v1592 = vshrl.u32 %v1591, 7
        %v1593 = vsub.s32 0, %v1592
        %v1594 = vrot.slane %v751, %v1593
        %v1595 = vlaneseq
        %v1596 = vshrl.u32 %v1595, 7
        %v1597 = vsub.s32 0, %v1596
        %v1598 = vrot.slane %v765, %v1597
        %v1599 = vlaneseq
        %v1600 = vshrl.u32 %v1599, 7
        %v1601 = vsub.s32 0, %v1600
        %v1602 = vrot.slane %v767, %v1601
        %v1603 = vlaneseq
        %v1604 = vshrl.u32 %v1603, 7
        %v1605 = vsub.s32 0, %v1604
        %v1606 = vrot.slane %v769, %v1605
        %v1607 = vlaneseq
        %v1608 = vshrl.u32 %v1607, 7
        %v1609 = vsub.s32 0, %v1608
        %v1610 = vrot.slane %v793, %v1609
        %v1611 = vlaneseq
        %v1612 = vshrl.u32 %v1611, 7
        %v1613 = vsub.s32 0, %v1612
        %v1614 = vrot.slane %v807, %v1613
        %v1615 = vlaneseq
        %v1616 = vshrl.u32 %v1615, 7
        %v1617 = vsub.s32 0, %v1616
        %v1618 = vrot.slane %v815, %v1617
        %v1619 = vlaneseq
        %v1620 = vshrl.u32 %v1619, 7
        %v1621 = vsub.s32 0, %v1620
        %v1622 = vrot.slane %v817, %v1621
        %v1623 = vlaneseq
        %v1624 = vshrl.u32 %v1623, 7
        %v1625 = vsub.s32 0, %v1624
        %v1626 = vrot.slane %v800, %v1625
        %v1627 = vlaneseq
        %v1628 = vshrl.u32 %v1627, 7
        %v1629 = vsub.s32 0, %v1628
        %v1630 = vrot.slane %v814, %v1629
        %v1631 = vlaneseq
        %v1632 = vshrl.u32 %v1631, 7
        %v1633 = vsub.s32 0, %v1632
        %v1634 = vrot.slane %v816, %v1633
        %v1635 = vlaneseq
        %v1636 = vshrl.u32 %v1635, 7
        %v1637 = vsub.s32 0, %v1636
        %v1638 = vrot.slane %v818, %v1637
        %v1655 = vlaneseq
        %v1656 = vshrl.u32 %v1655, 7
        %v1657 = vsub.s32 0, %v1656
        %v1658 = vrot.slane %v844, %v1657
        %v1659 = vlaneseq
        %v1660 = vshrl.u32 %v1659, 7
        %v1661 = vsub.s32 0, %v1660
        %v1662 = vrot.slane %v858, %v1661
        %v1663 = vlaneseq
        %v1664 = vshrl.u32 %v1663, 7
        %v1665 = vsub.s32 0, %v1664
        %v1666 = vrot.slane %v866, %v1665
        %v1667 = vlaneseq
        %v1668 = vshrl.u32 %v1667, 7
        %v1669 = vsub.s32 0, %v1668
        %v1670 = vrot.slane %v868, %v1669
        %v1671 = vlaneseq
        %v1672 = vshrl.u32 %v1671, 7
        %v1673 = vsub.s32 0, %v1672
        %v1674 = vrot.slane %v851, %v1673
        %v1675 = vlaneseq
        %v1676 = vshrl.u32 %v1675, 7
        %v1677 = vsub.s32 0, %v1676
        %v1678 = vrot.slane %v865, %v1677
        %v1679 = vlaneseq
        %v1680 = vshrl.u32 %v1679, 7
        %v1681 = vsub.s32 0, %v1680
        %v1682 = vrot.slane %v867, %v1681
        %v1683 = vlaneseq
        %v1684 = vshrl.u32 %v1683, 7
        %v1685 = vsub.s32 0, %v1684
        %v1686 = vrot.slane %v869, %v1685
        %v1687 = vlaneseq
        %v1688 = vshrl.u32 %v1687, 7
        %v1689 = vsub.s32 0, %v1688
        %v1690 = vrot.slane %v893, %v1689
        %v1691 = vlaneseq
        %v1692 = vshrl.u32 %v1691, 7
        %v1693 = vsub.s32 0, %v1692
        %v1694 = vrot.slane %v907, %v1693
        %v1695 = vlaneseq
        %v1696 = vshrl.u32 %v1695, 7
        %v1697 = vsub.s32 0, %v1696
        %v1698 = vrot.slane %v915, %v1697
        %v1699 = vlaneseq
        %v1700 = vshrl.u32 %v1699, 7
        %v1701 = vsub.s32 0, %v1700
        %v1702 = vrot.slane %v917, %v1701
        %v1703 = vlaneseq
        %v1704 = vshrl.u32 %v1703, 7
        %v1705 = vsub.s32 0, %v1704
        %v1706 = vrot.slane %v900, %v1705
        %v1707 = vlaneseq
        %v1708 = vshrl.u32 %v1707, 7
        %v1709 = vsub.s32 0, %v1708
        %v1710 = vrot.slane %v914, %v1709
        %v1711 = vlaneseq
        %v1712 = vshrl.u32 %v1711, 7
        %v1713 = vsub.s32 0, %v1712
        %v1714 = vrot.slane %v916, %v1713
        %v1715 = vlaneseq
        %v1716 = vshrl.u32 %v1715, 7
        %v1717 = vsub.s32 0, %v1716
        %v1718 = vrot.slane %v918, %v1717
        %v1735 = vlaneseq
        %v1736 = vshrl.u32 %v1735, 7
        %v1737 = vsub.s32 0, %v1736
        %v1738 = vrot.slane %v944, %v1737
        %v1739 = vlaneseq
        %v1740 = vshrl.u32 %v1739, 7
        %v1741 = vsub.s32 0, %v1740
        %v1742 = vrot.slane %v958, %v1741
        %v1743 = vlaneseq
        %v1744 = vshrl.u32 %v1743, 7
        %v1745 = vsub.s32 0, %v1744
        %v1746 = vrot.slane %v966, %v1745
        %v1747 = vlaneseq
        %v1748 = vshrl.u32 %v1747, 7
        %v1749 = vsub.s32 0, %v1748
        %v1750 = vrot.slane %v968, %v1749
        %v1751 = vlaneseq
        %v1752 = vshrl.u32 %v1751, 7
        %v1753 = vsub.s32 0, %v1752
        %v1754 = vrot.slane %v951, %v1753
        %v1755 = vlaneseq
        %v1756 = vshrl.u32 %v1755, 7
        %v1757 = vsub.s32 0, %v1756
        %v1758 = vrot.slane %v965, %v1757
        %v1759 = vlaneseq
        %v1760 = vshrl.u32 %v1759, 7
        %v1761 = vsub.s32 0, %v1760
        %v1762 = vrot.slane %v967, %v1761
        %v1763 = vlaneseq
        %v1764 = vshrl.u32 %v1763, 7
        %v1765 = vsub.s32 0, %v1764
        %v1766 = vrot.slane %v969, %v1765
        %v1767 = vlaneseq
        %v1768 = vshrl.u32 %v1767, 7
        %v1769 = vsub.s32 0, %v1768
        %v1770 = vrot.slane %v993, %v1769
        %v1771 = vlaneseq
        %v1772 = vshrl.u32 %v1771, 7
        %v1773 = vsub.s32 0, %v1772
        %v1774 = vrot.slane %v1007, %v1773
        %v1775 = vlaneseq
        %v1776 = vshrl.u32 %v1775, 7
        %v1777 = vsub.s32 0, %v1776
        %v1778 = vrot.slane %v1015, %v1777
        %v1779 = vlaneseq
        %v1780 = vshrl.u32 %v1779, 7
        %v1781 = vsub.s32 0, %v1780
        %v1782 = vrot.slane %v1017, %v1781
        %v1783 = vlaneseq
        %v1784 = vshrl.u32 %v1783, 7
        %v1785 = vsub.s32 0, %v1784
        %v1786 = vrot.slane %v1000, %v1785
        %v1787 = vlaneseq
        %v1788 = vshrl.u32 %v1787, 7
        %v1789 = vsub.s32 0, %v1788
        %v1790 = vrot.slane %v1014, %v1789
        %v1791 = vlaneseq
        %v1792 = vshrl.u32 %v1791, 7
        %v1793 = vsub.s32 0, %v1792
        %v1794 = vrot.slane %v1016, %v1793
        %v1795 = vlaneseq
        %v1796 = vshrl.u32 %v1795, 7
        %v1797 = vsub.s32 0, %v1796
        %v1798 = vrot.slane %v1018, %v1797
        %v1815 = vlaneseq
        %v1816 = vshrl.u32 %v1815, 7
        %v1817 = vsub.s32 0, %v1816
        %v1818 = vrot.slane %v1044, %v1817
        %v1819 = vlaneseq
        %v1820 = vshrl.u32 %v1819, 7
        %v1821 = vsub.s32 0, %v1820
        %v1822 = vrot.slane %v1058, %v1821
        %v1823 = vlaneseq
        %v1824 = vshrl.u32 %v1823, 7
        %v1825 = vsub.s32 0, %v1824
        %v1826 = vrot.slane %v1066, %v1825
        %v1827 = vlaneseq
        %v1828 = vshrl.u32 %v1827, 7
        %v1829 = vsub.s32 0, %v1828
        %v1830 = vrot.slane %v1068, %v1829
        %v1831 = vlaneseq
        %v1832 = vshrl.u32 %v1831, 7
        %v1833 = vsub.s32 0, %v1832
        %v1834 = vrot.slane %v1051, %v1833
        %v1835 = vlaneseq
        %v1836 = vshrl.u32 %v1835, 7
        %v1837 = vsub.s32 0, %v1836
        %v1838 = vrot.slane %v1065, %v1837
        %v1839 = vlaneseq
        %v1840 = vshrl.u32 %v1839, 7
        %v1841 = vsub.s32 0, %v1840
        %v1842 = vrot.slane %v1067, %v1841
        %v1843 = vlaneseq
        %v1844 = vshrl.u32 %v1843, 7
        %v1845 = vsub.s32 0, %v1844
        %v1846 = vrot.slane %v1069, %v1845
        %v1847 = vlaneseq
        %v1848 = vshrl.u32 %v1847, 7
        %v1849 = vsub.s32 0, %v1848
        %v1850 = vrot.slane %v1093, %v1849
        %v1851 = vlaneseq
        %v1852 = vshrl.u32 %v1851, 7
        %v1853 = vsub.s32 0, %v1852
        %v1854 = vrot.slane %v1107, %v1853
        %v1855 = vlaneseq
        %v1856 = vshrl.u32 %v1855, 7
        %v1857 = vsub.s32 0, %v1856
        %v1858 = vrot.slane %v1115, %v1857
        %v1859 = vlaneseq
        %v1860 = vshrl.u32 %v1859, 7
        %v1861 = vsub.s32 0, %v1860
        %v1862 = vrot.slane %v1117, %v1861
        %v1863 = vlaneseq
        %v1864 = vshrl.u32 %v1863, 7
        %v1865 = vsub.s32 0, %v1864
        %v1866 = vrot.slane %v1100, %v1865
        %v1867 = vlaneseq
        %v1868 = vshrl.u32 %v1867, 7
        %v1869 = vsub.s32 0, %v1868
        %v1870 = vrot.slane %v1114, %v1869
        %v1871 = vlaneseq
        %v1872 = vshrl.u32 %v1871, 7
        %v1873 = vsub.s32 0, %v1872
        %v1874 = vrot.slane %v1116, %v1873
        %v1875 = vlaneseq
        %v1876 = vshrl.u32 %v1875, 7
        %v1877 = vsub.s32 0, %v1876
        %v1878 = vrot.slane %v1118, %v1877
        %v1895 = vlaneseq
        %v1896 = vshrl.u32 %v1895, 7
        %v1897 = vsub.s32 0, %v1896
        %v1898 = vrot.slane %v1260, %v1897
        %v1899 = vlaneseq
        %v1900 = vshrl.u32 %v1899, 7
        %v1901 = vsub.s32 0, %v1900
        %v1902 = vrot.slane %v1274, %v1901
        %v1903 = vlaneseq
        %v1904 = vshrl.u32 %v1903, 7
        %v1905 = vsub.s32 0, %v1904
        %v1906 = vrot.slane %v1282, %v1905
        %v1907 = vlaneseq
        %v1908 = vshrl.u32 %v1907, 7
        %v1909 = vsub.s32 0, %v1908
        %v1910 = vrot.slane %v1284, %v1909
        %v1911 = vlaneseq
        %v1912 = vshrl.u32 %v1911, 7
        %v1913 = vsub.s32 0, %v1912
        %v1914 = vrot.slane %v1267, %v1913
        %v1915 = vlaneseq
        %v1916 = vshrl.u32 %v1915, 7
        %v1917 = vsub.s32 0, %v1916
        %v1918 = vrot.slane %v1281, %v1917
        %v1919 = vlaneseq
        %v1920 = vshrl.u32 %v1919, 7
        %v1921 = vsub.s32 0, %v1920
        %v1922 = vrot.slane %v1283, %v1921
        %v1923 = vlaneseq
        %v1924 = vshrl.u32 %v1923, 7
        %v1925 = vsub.s32 0, %v1924
        %v1926 = vrot.slane %v1285, %v1925
        %v1927 = vlaneseq
        %v1928 = vshrl.u32 %v1927, 7
        %v1929 = vsub.s32 0, %v1928
        %v1930 = vrot.slane %v1309, %v1929
        %v1931 = vlaneseq
        %v1932 = vshrl.u32 %v1931, 7
        %v1933 = vsub.s32 0, %v1932
        %v1934 = vrot.slane %v1323, %v1933
        %v1935 = vlaneseq
        %v1936 = vshrl.u32 %v1935, 7
        %v1937 = vsub.s32 0, %v1936
        %v1938 = vrot.slane %v1331, %v1937
        %v1939 = vlaneseq
        %v1940 = vshrl.u32 %v1939, 7
        %v1941 = vsub.s32 0, %v1940
        %v1942 = vrot.slane %v1333, %v1941
        %v1943 = vlaneseq
        %v1944 = vshrl.u32 %v1943, 7
        %v1945 = vsub.s32 0, %v1944
        %v1946 = vrot.slane %v1316, %v1945
        %v1947 = vlaneseq
        %v1948 = vshrl.u32 %v1947, 7
        %v1949 = vsub.s32 0, %v1948
        %v1950 = vrot.slane %v1330, %v1949
        %v1951 = vlaneseq
        %v1952 = vshrl.u32 %v1951, 7
        %v1953 = vsub.s32 0, %v1952
        %v1954 = vrot.slane %v1332, %v1953
        %v1955 = vlaneseq
        %v1956 = vshrl.u32 %v1955, 7
        %v1957 = vsub.s32 0, %v1956
        %v1958 = vrot.slane %v1334, %v1957
        %vm1975 = vcmask 1040384
        %v1976 = vsel %vm1975, %v328, %v1338
        %v1977 = vsel %vm1975, %v342, %v1342
        %v1978 = vsel %vm1975, %v350, %v1346
        %v1979 = vsel %vm1975, %v352, %v1350
        %v1980 = vsel %vm1975, %v335, %v1354
        %v1981 = vsel %vm1975, %v349, %v1358
        %v1982 = vsel %vm1975, %v351, %v1362
        %v1983 = vsel %vm1975, %v353, %v1366
        %v1984 = vsel %vm1975, %v377, %v1370
        %v1985 = vsel %vm1975, %v391, %v1374
        %v1986 = vsel %vm1975, %v399, %v1378
        %v1987 = vsel %vm1975, %v401, %v1382
        %v1988 = vsel %vm1975, %v384, %v1386
        %v1989 = vsel %vm1975, %v398, %v1390
        %v1990 = vsel %vm1975, %v400, %v1394
        %v1991 = vsel %vm1975, %v402, %v1398
        %vm1992 = vcmask 1041408
        %v1993 = vsel %vm1992, %v1976, %v1418
        %v1994 = vsel %vm1992, %v1977, %v1422
        %v1995 = vsel %vm1992, %v1978, %v1426
        %v1996 = vsel %vm1992, %v1979, %v1430
        %v1997 = vsel %vm1992, %v1980, %v1434
        %v1998 = vsel %vm1992, %v1981, %v1438
        %v1999 = vsel %vm1992, %v1982, %v1442
        %v2000 = vsel %vm1992, %v1983, %v1446
        %v2001 = vsel %vm1992, %v1984, %v1450
        %v2002 = vsel %vm1992, %v1985, %v1454
        %v2003 = vsel %vm1992, %v1986, %v1458
        %v2004 = vsel %vm1992, %v1987, %v1462
        %v2005 = vsel %vm1992, %v1988, %v1466
        %v2006 = vsel %vm1992, %v1989, %v1470
        %v2007 = vsel %vm1992, %v1990, %v1474
        %v2008 = vsel %vm1992, %v1991, %v1478
        %vm2009 = vcmask 1042432
        %v2010 = vsel %vm2009, %v1993, %v1498
        %v2011 = vsel %vm2009, %v1994, %v1502
        %v2012 = vsel %vm2009, %v1995, %v1506
        %v2013 = vsel %vm2009, %v1996, %v1510
        %v2014 = vsel %vm2009, %v1997, %v1514
        %v2015 = vsel %vm2009, %v1998, %v1518
        %v2016 = vsel %vm2009, %v1999, %v1522
        %v2017 = vsel %vm2009, %v2000, %v1526
        %v2018 = vsel %vm2009, %v2001, %v1530
        %v2019 = vsel %vm2009, %v2002, %v1534
        %v2020 = vsel %vm2009, %v2003, %v1538
        %v2021 = vsel %vm2009, %v2004, %v1542
        %v2022 = vsel %vm2009, %v2005, %v1546
        %v2023 = vsel %vm2009, %v2006, %v1550
        %v2024 = vsel %vm2009, %v2007, %v1554
        %v2025 = vsel %vm2009, %v2008, %v1558
        %vm2026 = vcmask 1043456
        %v2027 = vsel %vm2026, %v2010, %v1578
        %v2028 = vsel %vm2026, %v2011, %v1582
        %v2029 = vsel %vm2026, %v2012, %v1586
        %v2030 = vsel %vm2026, %v2013, %v1590
        %v2031 = vsel %vm2026, %v2014, %v1594
        %v2032 = vsel %vm2026, %v2015, %v1598
        %v2033 = vsel %vm2026, %v2016, %v1602
        %v2034 = vsel %vm2026, %v2017, %v1606
        %v2035 = vsel %vm2026, %v2018, %v1610
        %v2036 = vsel %vm2026, %v2019, %v1614
        %v2037 = vsel %vm2026, %v2020, %v1618
        %v2038 = vsel %vm2026, %v2021, %v1622
        %v2039 = vsel %vm2026, %v2022, %v1626
        %v2040 = vsel %vm2026, %v2023, %v1630
        %v2041 = vsel %vm2026, %v2024, %v1634
        %v2042 = vsel %vm2026, %v2025, %v1638
        %vm2043 = vcmask 1044480
        %v2044 = vsel %vm2043, %v2027, %v1658
        %v2045 = vsel %vm2043, %v2028, %v1662
        %v2046 = vsel %vm2043, %v2029, %v1666
        %v2047 = vsel %vm2043, %v2030, %v1670
        %v2048 = vsel %vm2043, %v2031, %v1674
        %v2049 = vsel %vm2043, %v2032, %v1678
        %v2050 = vsel %vm2043, %v2033, %v1682
        %v2051 = vsel %vm2043, %v2034, %v1686
        %v2052 = vsel %vm2043, %v2035, %v1690
        %v2053 = vsel %vm2043, %v2036, %v1694
        %v2054 = vsel %vm2043, %v2037, %v1698
        %v2055 = vsel %vm2043, %v2038, %v1702
        %v2056 = vsel %vm2043, %v2039, %v1706
        %v2057 = vsel %vm2043, %v2040, %v1710
        %v2058 = vsel %vm2043, %v2041, %v1714
        %v2059 = vsel %vm2043, %v2042, %v1718
        %vm2060 = vcmask 1045504
        %v2061 = vsel %vm2060, %v2044, %v1738
        %v2062 = vsel %vm2060, %v2045, %v1742
        %v2063 = vsel %vm2060, %v2046, %v1746
        %v2064 = vsel %vm2060, %v2047, %v1750
        %v2065 = vsel %vm2060, %v2048, %v1754
        %v2066 = vsel %vm2060, %v2049, %v1758
        %v2067 = vsel %vm2060, %v2050, %v1762
        %v2068 = vsel %vm2060, %v2051, %v1766
        %v2069 = vsel %vm2060, %v2052, %v1770
        %v2070 = vsel %vm2060, %v2053, %v1774
        %v2071 = vsel %vm2060, %v2054, %v1778
        %v2072 = vsel %vm2060, %v2055, %v1782
        %v2073 = vsel %vm2060, %v2056, %v1786
        %v2074 = vsel %vm2060, %v2057, %v1790
        %v2075 = vsel %vm2060, %v2058, %v1794
        %v2076 = vsel %vm2060, %v2059, %v1798
        %vm2077 = vcmask 1046528
        %v2078 = vsel %vm2077, %v2061, %v1818
        %v2079 = vsel %vm2077, %v2062, %v1822
        %v2080 = vsel %vm2077, %v2063, %v1826
        %v2081 = vsel %vm2077, %v2064, %v1830
        %v2082 = vsel %vm2077, %v2065, %v1834
        %v2083 = vsel %vm2077, %v2066, %v1838
        %v2084 = vsel %vm2077, %v2067, %v1842
        %v2085 = vsel %vm2077, %v2068, %v1846
        %v2086 = vsel %vm2077, %v2069, %v1850
        %v2087 = vsel %vm2077, %v2070, %v1854
        %v2088 = vsel %vm2077, %v2071, %v1858
        %v2089 = vsel %vm2077, %v2072, %v1862
        %v2090 = vsel %vm2077, %v2073, %v1866
        %v2091 = vsel %vm2077, %v2074, %v1870
        %v2092 = vsel %vm2077, %v2075, %v1874
        %v2093 = vsel %vm2077, %v2076, %v1878
        %v2094 = vsel %vm1975, %v1144, %v1898
        %v2095 = vsel %vm1975, %v1158, %v1902
        %v2096 = vsel %vm1975, %v1166, %v1906
        %v2097 = vsel %vm1975, %v1168, %v1910
        %v2098 = vsel %vm1975, %v1151, %v1914
        %v2099 = vsel %vm1975, %v1165, %v1918
        %v2100 = vsel %vm1975, %v1167, %v1922
        %v2101 = vsel %vm1975, %v1169, %v1926
        %v2102 = vsel %vm1975, %v1193, %v1930
        %v2103 = vsel %vm1975, %v1207, %v1934
        %v2104 = vsel %vm1975, %v1215, %v1938
        %v2105 = vsel %vm1975, %v1217, %v1942
        %v2106 = vsel %vm1975, %v1200, %v1946
        %v2107 = vsel %vm1975, %v1214, %v1950
        %v2108 = vsel %vm1975, %v1216, %v1954
        %v2109 = vsel %vm1975, %v1218, %v1958
        %2110 = vst [vmem:[%s148] sm:$0xff] %v2078
        %2111 = vst [vmem:[%s148 + $0x8] sm:$0x3] %v2094
        %2112 = vst [vmem:[%s148 + $0x10] sm:$0xff] %v2079
        %2113 = vst [vmem:[%s148 + $0x18] sm:$0x3] %v2095
        %2114 = vst [vmem:[%s148 + $0x20] sm:$0xff] %v2080
        %2115 = vst [vmem:[%s148 + $0x28] sm:$0x3] %v2096
        %2116 = vst [vmem:[%s148 + $0x30] sm:$0xff] %v2081
        %2117 = vst [vmem:[%s148 + $0x38] sm:$0x3] %v2097
        %2118 = vst [vmem:[%s148 + $0x40] sm:$0xff] %v2082
        %2119 = vst [vmem:[%s148 + $0x48] sm:$0x3] %v2098
        %2120 = vst [vmem:[%s148 + $0x50] sm:$0xff] %v2083
        %2121 = vst [vmem:[%s148 + $0x58] sm:$0x3] %v2099
        %2122 = vst [vmem:[%s148 + $0x60] sm:$0xff] %v2084
        %2123 = vst [vmem:[%s148 + $0x68] sm:$0x3] %v2100
        %2124 = vst [vmem:[%s148 + $0x70] sm:$0xff] %v2085
        %2125 = vst [vmem:[%s148 + $0x78] sm:$0x3] %v2101
        %2126 = vst [vmem:[%s148 + $0x80] sm:$0xff] %v2086
        %2127 = vst [vmem:[%s148 + $0x88] sm:$0x3] %v2102
        %2128 = vst [vmem:[%s148 + $0x90] sm:$0xff] %v2087
        %2129 = vst [vmem:[%s148 + $0x98] sm:$0x3] %v2103
        %2130 = vst [vmem:[%s148 + $0xa0] sm:$0xff] %v2088
        %2131 = vst [vmem:[%s148 + $0xa8] sm:$0x3] %v2104
        %2132 = vst [vmem:[%s148 + $0xb0] sm:$0xff] %v2089
        %2133 = vst [vmem:[%s148 + $0xb8] sm:$0x3] %v2105
        %2134 = vst [vmem:[%s148 + $0xc0] sm:$0xff] %v2090
        %2135 = vst [vmem:[%s148 + $0xc8] sm:$0x3] %v2106
        %2136 = vst [vmem:[%s148 + $0xd0] sm:$0xff] %v2091
        %2137 = vst [vmem:[%s148 + $0xd8] sm:$0x3] %v2107
        %2138 = vst [vmem:[%s148 + $0xe0] sm:$0xff] %v2092
        %2139 = vst [vmem:[%s148 + $0xe8] sm:$0x3] %v2108
        %2140 = vst [vmem:[%s148 + $0xf0] sm:$0xff] %v2093
        %2141 = vst [vmem:[%s148 + $0xf8] sm:$0x3] %v2109
        %s2142 = sand.u32 %s65, 1
        %s2143 = sand.u32 %s65, 1
        %s2144 = smul.addr %s2143, 256
        %s2145 = scalar_lea.vmem [#allocation4], %s2144
        // Predicated region
        $region29: #{tpu_custom_call.1} parent=23 // pred_check
          %p2146 = pneg %p75
        $region30: #{tpu_custom_call.1} parent=23 // pred_check_branch
          %2148 = sbr.rel (%p2146) target = $region32
        $region31: #{tpu_custom_call.1} parent=23 // pred_region
          %s2149 = smul.u32 16, %s19
          %s2150 = smul.addr %s2149, 4
          %s2151 = sadd.s32 %s20, %s2150
          %s2152 = smul.addr %s2151, 8
          %s2153 = scalar_lea.vmem %s1, %s2152
          // Predicated region
          $region33: #{tpu_custom_call.1} parent=31 // pred_check
            _
          $region34: #{tpu_custom_call.1} parent=31 // pred_check_branch
            %2155 = sbr.rel (0) target = $region36
          $region35: #{tpu_custom_call.1} parent=31 // pred_region
            // Predicated region
            $region37: #{tpu_custom_call.1} parent=35 // pred_check
              _
            $region38: #{tpu_custom_call.1} parent=35 // pred_check_branch
              %2157 = sbr.rel (0) target = $region40
            $region39: #{tpu_custom_call.1} parent=35 // pred_region
              // Predicated region
              $region52: #{tpu_custom_call.1} parent=39 // pred_check
                _
              $region53: #{tpu_custom_call.1} parent=39 // pred_check_branch
                %2234 = sbr.rel (0) target = $region55
              $region54: #{tpu_custom_call.1} parent=39 // pred_region
                loop: start=0, step=1, limit=1
                $region56: #{tpu_custom_call.1} parent=54 // loop_pre_header
                  _
                $region57: #{tpu_custom_call.1} parent=54 // loop_header
                  %s2236 = sphi 0, %s2240
                  %p2237 = scmp.ge.s32.totalorder %s2236, 1
                  %s2241 = sphi %s2145, %s2145
                  %s2242 = sphi %s2153, %s2153
                $region58: #{tpu_custom_call.1} parent=54 // loop_header_branch
                  %2239 = sbr.rel (%p2237) target = $region62
                $region59: #{tpu_custom_call.1} parent=54 // loop_body
                  %v2243 = vld [vmem:[%s2241] sm:$0xff]
                  %2244 = vst [vmem:[%s2242] sm:$0xff] %v2243
                  %v2245 = vld [vmem:[%s2241 + $0x8] sm:$0xff]
                  %2246 = vst [vmem:[%s2242 + $0x10] sm:$0xff] %v2245
                  %v2247 = vld [vmem:[%s2241 + $0x10] sm:$0xff]
                  %2248 = vst [vmem:[%s2242 + $0x20] sm:$0xff] %v2247
                  %v2249 = vld [vmem:[%s2241 + $0x18] sm:$0xff]
                  %2250 = vst [vmem:[%s2242 + $0x30] sm:$0xff] %v2249
                  %v2251 = vld [vmem:[%s2241 + $0x20] sm:$0xff]
                  %2252 = vst [vmem:[%s2242 + $0x40] sm:$0xff] %v2251
                  %v2253 = vld [vmem:[%s2241 + $0x28] sm:$0xff]
                  %2254 = vst [vmem:[%s2242 + $0x50] sm:$0xff] %v2253
                  %v2255 = vld [vmem:[%s2241 + $0x30] sm:$0xff]
                  %2256 = vst [vmem:[%s2242 + $0x60] sm:$0xff] %v2255
                  %v2257 = vld [vmem:[%s2241 + $0x38] sm:$0xff]
                  %2258 = vst [vmem:[%s2242 + $0x70] sm:$0xff] %v2257
                  %v2259 = vld [vmem:[%s2241 + $0x40] sm:$0xff]
                  %2260 = vst [vmem:[%s2242 + $0x80] sm:$0xff] %v2259
                  %v2261 = vld [vmem:[%s2241 + $0x48] sm:$0xff]
                  %2262 = vst [vmem:[%s2242 + $0x90] sm:$0xff] %v2261
                  %v2263 = vld [vmem:[%s2241 + $0x50] sm:$0xff]
                  %2264 = vst [vmem:[%s2242 + $0xa0] sm:$0xff] %v2263
                  %v2265 = vld [vmem:[%s2241 + $0x58] sm:$0xff]
                  %2266 = vst [vmem:[%s2242 + $0xb0] sm:$0xff] %v2265
                  %v2267 = vld [vmem:[%s2241 + $0x60] sm:$0xff]
                  %2268 = vst [vmem:[%s2242 + $0xc0] sm:$0xff] %v2267
                  %v2269 = vld [vmem:[%s2241 + $0x68] sm:$0xff]
                  %2270 = vst [vmem:[%s2242 + $0xd0] sm:$0xff] %v2269
                  %v2271 = vld [vmem:[%s2241 + $0x70] sm:$0xff]
                  %2272 = vst [vmem:[%s2242 + $0xe0] sm:$0xff] %v2271
                  %v2273 = vld [vmem:[%s2241 + $0x78] sm:$0xff]
                  %2274 = vst [vmem:[%s2242 + $0xf0] sm:$0xff] %v2273
                  %v2275 = vld [vmem:[%s2241 + $0x80] sm:$0xff]
                  %2276 = vst [vmem:[%s2242 + $0x100] sm:$0xff] %v2275
                  %v2277 = vld [vmem:[%s2241 + $0x88] sm:$0xff]
                  %2278 = vst [vmem:[%s2242 + $0x110] sm:$0xff] %v2277
                  %v2279 = vld [vmem:[%s2241 + $0x90] sm:$0xff]
                  %2280 = vst [vmem:[%s2242 + $0x120] sm:$0xff] %v2279
                  %v2281 = vld [vmem:[%s2241 + $0x98] sm:$0xff]
                  %2282 = vst [vmem:[%s2242 + $0x130] sm:$0xff] %v2281
                  %v2283 = vld [vmem:[%s2241 + $0xa0] sm:$0xff]
                  %2284 = vst [vmem:[%s2242 + $0x140] sm:$0xff] %v2283
                  %v2285 = vld [vmem:[%s2241 + $0xa8] sm:$0xff]
                  %2286 = vst [vmem:[%s2242 + $0x150] sm:$0xff] %v2285
                  %v2287 = vld [vmem:[%s2241 + $0xb0] sm:$0xff]
                  %2288 = vst [vmem:[%s2242 + $0x160] sm:$0xff] %v2287
                  %v2289 = vld [vmem:[%s2241 + $0xb8] sm:$0xff]
                  %2290 = vst [vmem:[%s2242 + $0x170] sm:$0xff] %v2289
                  %v2291 = vld [vmem:[%s2241 + $0xc0] sm:$0xff]
                  %2292 = vst [vmem:[%s2242 + $0x180] sm:$0xff] %v2291
                  %v2293 = vld [vmem:[%s2241 + $0xc8] sm:$0xff]
                  %2294 = vst [vmem:[%s2242 + $0x190] sm:$0xff] %v2293
                  %v2295 = vld [vmem:[%s2241 + $0xd0] sm:$0xff]
                  %2296 = vst [vmem:[%s2242 + $0x1a0] sm:$0xff] %v2295
                  %v2297 = vld [vmem:[%s2241 + $0xd8] sm:$0xff]
                  %2298 = vst [vmem:[%s2242 + $0x1b0] sm:$0xff] %v2297
                  %v2299 = vld [vmem:[%s2241 + $0xe0] sm:$0xff]
                  %2300 = vst [vmem:[%s2242 + $0x1c0] sm:$0xff] %v2299
                  %v2301 = vld [vmem:[%s2241 + $0xe8] sm:$0xff]
                  %2302 = vst [vmem:[%s2242 + $0x1d0] sm:$0xff] %v2301
                  %v2303 = vld [vmem:[%s2241 + $0xf0] sm:$0xff]
                  %2304 = vst [vmem:[%s2242 + $0x1e0] sm:$0xff] %v2303
                  %v2305 = vld [vmem:[%s2241 + $0xf8] sm:$0xff]
                  %2306 = vst [vmem:[%s2242 + $0x1f0] sm:$0xff] %v2305
                $region60: #{tpu_custom_call.1} parent=54 // loop_footer
                  %s2240 = sadd.s32 1, %s2236
                $region61: #{tpu_custom_call.1} parent=54 // loop_footer_branch
                  %2235 = sbr.rel target = $region57
                $region62: #{tpu_custom_call.1} parent=54 // loop_exit
                  _
              $region55: #{tpu_custom_call.1} parent=39 // pred_fallthru
                _
              // Predicated region
              $region63: #{tpu_custom_call.1} parent=39 // pred_check
                _
              $region64: #{tpu_custom_call.1} parent=39 // pred_check_branch
                %2308 = sbr.rel target = $region66
              $region65: #{tpu_custom_call.1} parent=39 // pred_region
                _
              $region66: #{tpu_custom_call.1} parent=39 // pred_fallthru
                _
            $region40: #{tpu_custom_call.1} parent=35 // pred_fallthru
              _
            // Predicated region
            $region41: #{tpu_custom_call.1} parent=35 // pred_check
              _
            $region42: #{tpu_custom_call.1} parent=35 // pred_check_branch
              %2159 = sbr.rel target = $region44
            $region43: #{tpu_custom_call.1} parent=35 // pred_region
              loop: start=0, step=1, limit=1
              $region45: #{tpu_custom_call.1} parent=43 // loop_pre_header
                _
              $region46: #{tpu_custom_call.1} parent=43 // loop_header
                %s2162 = sphi 0, %s2166
                %p2163 = scmp.ge.s32.totalorder %s2162, 1
                %s2167 = sphi %s2145, %s2145
                %s2168 = sphi %s2153, %s2153
              $region47: #{tpu_custom_call.1} parent=43 // loop_header_branch
                %2165 = sbr.rel (%p2163) target = $region51
              $region48: #{tpu_custom_call.1} parent=43 // loop_body
                %v2169 = vld [vmem:[%s2167] sm:$0xff]
                %2170 = vst [vmem:[%s2168] sm:$0xff] %v2169
                %v2171 = vld [vmem:[%s2167 + $0x8] sm:$0xff]
                %2172 = vst [vmem:[%s2168 + $0x10] sm:$0xff] %v2171
                %v2173 = vld [vmem:[%s2167 + $0x10] sm:$0xff]
                %2174 = vst [vmem:[%s2168 + $0x20] sm:$0xff] %v2173
                %v2175 = vld [vmem:[%s2167 + $0x18] sm:$0xff]
                %2176 = vst [vmem:[%s2168 + $0x30] sm:$0xff] %v2175
                %v2177 = vld [vmem:[%s2167 + $0x20] sm:$0xff]
                %2178 = vst [vmem:[%s2168 + $0x40] sm:$0xff] %v2177
                %v2179 = vld [vmem:[%s2167 + $0x28] sm:$0xff]
                %2180 = vst [vmem:[%s2168 + $0x50] sm:$0xff] %v2179
                %v2181 = vld [vmem:[%s2167 + $0x30] sm:$0xff]
                %2182 = vst [vmem:[%s2168 + $0x60] sm:$0xff] %v2181
                %v2183 = vld [vmem:[%s2167 + $0x38] sm:$0xff]
                %2184 = vst [vmem:[%s2168 + $0x70] sm:$0xff] %v2183
                %v2185 = vld [vmem:[%s2167 + $0x40] sm:$0xff]
                %2186 = vst [vmem:[%s2168 + $0x80] sm:$0xff] %v2185
                %v2187 = vld [vmem:[%s2167 + $0x48] sm:$0xff]
                %2188 = vst [vmem:[%s2168 + $0x90] sm:$0xff] %v2187
                %v2189 = vld [vmem:[%s2167 + $0x50] sm:$0xff]
                %2190 = vst [vmem:[%s2168 + $0xa0] sm:$0xff] %v2189
                %v2191 = vld [vmem:[%s2167 + $0x58] sm:$0xff]
                %2192 = vst [vmem:[%s2168 + $0xb0] sm:$0xff] %v2191
                %v2193 = vld [vmem:[%s2167 + $0x60] sm:$0xff]
                %2194 = vst [vmem:[%s2168 + $0xc0] sm:$0xff] %v2193
                %v2195 = vld [vmem:[%s2167 + $0x68] sm:$0xff]
                %2196 = vst [vmem:[%s2168 + $0xd0] sm:$0xff] %v2195
                %v2197 = vld [vmem:[%s2167 + $0x70] sm:$0xff]
                %2198 = vst [vmem:[%s2168 + $0xe0] sm:$0xff] %v2197
                %v2199 = vld [vmem:[%s2167 + $0x78] sm:$0xff]
                %2200 = vst [vmem:[%s2168 + $0xf0] sm:$0xff] %v2199
                %v2201 = vld [vmem:[%s2167 + $0x80] sm:$0xff]
                %2202 = vst [vmem:[%s2168 + $0x100] sm:$0xff] %v2201
                %v2203 = vld [vmem:[%s2167 + $0x88] sm:$0xff]
                %2204 = vst [vmem:[%s2168 + $0x110] sm:$0xff] %v2203
                %v2205 = vld [vmem:[%s2167 + $0x90] sm:$0xff]
                %2206 = vst [vmem:[%s2168 + $0x120] sm:$0xff] %v2205
                %v2207 = vld [vmem:[%s2167 + $0x98] sm:$0xff]
                %2208 = vst [vmem:[%s2168 + $0x130] sm:$0xff] %v2207
                %v2209 = vld [vmem:[%s2167 + $0xa0] sm:$0xff]
                %2210 = vst [vmem:[%s2168 + $0x140] sm:$0xff] %v2209
                %v2211 = vld [vmem:[%s2167 + $0xa8] sm:$0xff]
                %2212 = vst [vmem:[%s2168 + $0x150] sm:$0xff] %v2211
                %v2213 = vld [vmem:[%s2167 + $0xb0] sm:$0xff]
                %2214 = vst [vmem:[%s2168 + $0x160] sm:$0xff] %v2213
                %v2215 = vld [vmem:[%s2167 + $0xb8] sm:$0xff]
                %2216 = vst [vmem:[%s2168 + $0x170] sm:$0xff] %v2215
                %v2217 = vld [vmem:[%s2167 + $0xc0] sm:$0xff]
                %2218 = vst [vmem:[%s2168 + $0x180] sm:$0xff] %v2217
                %v2219 = vld [vmem:[%s2167 + $0xc8] sm:$0xff]
                %2220 = vst [vmem:[%s2168 + $0x190] sm:$0xff] %v2219
                %v2221 = vld [vmem:[%s2167 + $0xd0] sm:$0xff]
                %2222 = vst [vmem:[%s2168 + $0x1a0] sm:$0xff] %v2221
                %v2223 = vld [vmem:[%s2167 + $0xd8] sm:$0xff]
                %2224 = vst [vmem:[%s2168 + $0x1b0] sm:$0xff] %v2223
                %v2225 = vld [vmem:[%s2167 + $0xe0] sm:$0xff]
                %2226 = vst [vmem:[%s2168 + $0x1c0] sm:$0xff] %v2225
                %v2227 = vld [vmem:[%s2167 + $0xe8] sm:$0xff]
                %2228 = vst [vmem:[%s2168 + $0x1d0] sm:$0xff] %v2227
                %v2229 = vld [vmem:[%s2167 + $0xf0] sm:$0xff]
                %2230 = vst [vmem:[%s2168 + $0x1e0] sm:$0xff] %v2229
                %v2231 = vld [vmem:[%s2167 + $0xf8] sm:$0xff]
                %2232 = vst [vmem:[%s2168 + $0x1f0] sm:$0xff] %v2231
              $region49: #{tpu_custom_call.1} parent=43 // loop_footer
                %s2166 = sadd.s32 1, %s2162
              $region50: #{tpu_custom_call.1} parent=43 // loop_footer_branch
                %2161 = sbr.rel target = $region46
              $region51: #{tpu_custom_call.1} parent=43 // loop_exit
                _
            $region44: #{tpu_custom_call.1} parent=35 // pred_fallthru
              _
          $region36: #{tpu_custom_call.1} parent=31 // pred_fallthru
            _
          %2309 = vnop
        $region32: #{tpu_custom_call.1} parent=23 // pred_fallthru
          _
      $region24: #{tpu_custom_call.1} parent=5 // pred_fallthru
        _
      %p2310 = scmp.le.s32.totalorder 2, %s10
      // Predicated region
      $region67: #{tpu_custom_call.1} parent=5 // pred_check
        %p2311 = pneg %p2310
      $region68: #{tpu_custom_call.1} parent=5 // pred_check_branch
        %2313 = sbr.rel (%p2311) target = $region70
      $region69: #{tpu_custom_call.1} parent=5 // pred_region
        %s2314 = ssub.s32 %s10, 2
        // Predicated region
        $region71: #{tpu_custom_call.1} parent=69 // pred_check
          %p2315 = pneg %p81
        $region72: #{tpu_custom_call.1} parent=69 // pred_check_branch
          %2317 = sbr.rel (%p2315) target = $region74
        $region73: #{tpu_custom_call.1} parent=69 // pred_region
          %s2318 = sand.u32 %s66, 1
          %s2319 = sand.u32 %s66, 1
          %s2320 = smul.addr %s2319, 256
          %s2321 = scalar_lea.vmem [#allocation4], %s2320
        $region74: #{tpu_custom_call.1} parent=69 // pred_fallthru
          _
      $region70: #{tpu_custom_call.1} parent=5 // pred_fallthru
        _
    $region6: #{tpu_custom_call.1} parent=1 // loop_footer
      %s14 = sadd.s32 1, %s10
    $region7: #{tpu_custom_call.1} parent=1 // loop_footer_branch
      %9 = sbr.rel target = $region3
    $region8: #{tpu_custom_call.1} parent=1 // loop_exit
      _
    %2322 = vsyncpa [#allocation3], 1
    %s2323 = scalar_lea.sflag [#allocation3], 1
    %2324 = vsyncpa %s2323, 1

</llo_original>
